<compile_context>
chip_gen: v7x
topology: tpu7x:2x2x1
jax: 0.10.0
libtpu: 0.0.40
codegen_flags: <defaults>
</compile_context>

<pallas_src>
import jax
import jax.numpy as jnp
from jax.experimental import pallas as pl
from jax.experimental.pallas import tpu as pltpu

# ---- small synthetic GatorTron-like config ----
VOCAB = 64
HIDDEN = 32
HEADS = 2
HEAD_DIM = HIDDEN // HEADS
FFN = 64
LAYERS = 2
MAX_POS = 16
TYPE_VOCAB = 2
NUM_LABELS = 4
LN_EPS = 1e-12
LANE = 128          # classifier output padded to a lane-dense 128-wide slab


def _layernorm(x, g, b):
    mu = jnp.mean(x, axis=-1, keepdims=True)
    var = jnp.mean(jnp.square(x - mu), axis=-1, keepdims=True)
    return (x - mu) * jax.lax.rsqrt(var + LN_EPS) * g + b


# ---------------- fused encoder + classifier kernel (one batch per step) ----------------

def _encoder_kernel(emb_ref, bias_ref, eg_ref, eb_ref,
                    wqkv_ref, bqkv_ref, wo_ref, bo_ref, g1_ref, bln1_ref,
                    w1_ref, b1_ref, w2_ref, b2_ref, g2_ref, bln2_ref,
                    cw_ref, cb_ref, logits_ref):
    """One grid step == one batch element; both layers unrolled in-kernel."""
    bf16 = jnp.bfloat16

    # Embedding LayerNorm (f32).
    h = _layernorm(emb_ref[...], eg_ref[...], eb_ref[...])        # (S, HIDDEN) f32
    key_bias = bias_ref[0]                                         # (1, S): 0 attend / -1e9 pad
    scale = 1.0 / (HEAD_DIM ** 0.5)

    # Static unroll over layers: all weights are VMEM-resident at once.
    for l in range(LAYERS):
        # Fused QKV projection: one MXU pass (bf16 operands, f32 accumulate).
        qkv = jnp.dot(h.astype(bf16), wqkv_ref[l],
                      preferred_element_type=jnp.float32) + bqkv_ref[l]   # (S, 3H) f32
        wo_l = wo_ref[l]                                                   # (H, H) bf16

        # NOTE: padded query rows still attend to live keys; harmless because
        # only the CLS row is consumed downstream.
        attn = None
        for hd in range(HEADS):
            # TODO(synk): HEAD_DIM=16 column slices under-occupy the 128-wide
            # lanes; at real GatorTron head sizes these are lane-aligned.
            q_h = qkv[:, hd * HEAD_DIM:(hd + 1) * HEAD_DIM].astype(bf16)
            k_h = qkv[:, HIDDEN + hd * HEAD_DIM:HIDDEN + (hd + 1) * HEAD_DIM].astype(bf16)
            v_h = qkv[:, 2 * HIDDEN + hd * HEAD_DIM:2 * HIDDEN + (hd + 1) * HEAD_DIM].astype(bf16)

            s = jnp.dot(q_h, k_h.T, preferred_element_type=jnp.float32) * scale + key_bias
            s = s - jnp.max(s, axis=-1, keepdims=True)
            p = jnp.exp(s)
            p = p * pl.reciprocal(jnp.sum(p, axis=-1, keepdims=True), approx=True)
            ctx_h = jnp.dot(p.astype(bf16), v_h, preferred_element_type=jnp.float32)

            # Fold the output projection per head: no lane-dim concat of contexts.
            part = jnp.dot(ctx_h.astype(bf16),
                           wo_l[hd * HEAD_DIM:(hd + 1) * HEAD_DIM, :],
                           preferred_element_type=jnp.float32)
            attn = part if attn is None else attn + part

        attn = attn + bo_ref[l]
        h_mid = _layernorm(attn + h, g1_ref[l], bln1_ref[l])

        ffn = jnp.dot(h_mid.astype(bf16), w1_ref[l],
                      preferred_element_type=jnp.float32) + b1_ref[l]
        # TODO(synk): HF/Megatron-BERT GatorTron uses exact erf GELU; tanh approx here.
        ffn = jax.nn.gelu(ffn, approximate=True)
        ffn = jnp.dot(ffn.astype(bf16), w2_ref[l],
                      preferred_element_type=jnp.float32) + b2_ref[l]
        h = _layernorm(ffn + h_mid, g2_ref[l], bln2_ref[l])

    # Classifier only for the CLS row (token 0); nn.Dropout(0.1) is identity at
    # inference.  Output is a lane-dense (1, 128) slab; wrapper slices labels.
    cls = h[0:1, :].astype(bf16)
    logits = jnp.dot(cls, cw_ref[...], preferred_element_type=jnp.float32) + cb_ref[...]
    logits_ref[...] = logits[None]


# ---------------- parameters ----------------

def init_params(key):
    def nrm(k, shape, scale=0.02):
        return (scale * jax.random.normal(k, shape)).astype(jnp.float32)

    keys = iter(jax.random.split(key, 3 + LAYERS * 6 + 1))
    params = {
        "word_emb": nrm(next(keys), (VOCAB, HIDDEN)),
        "pos_emb": nrm(next(keys), (MAX_POS, HIDDEN)),
        "type_emb": nrm(next(keys), (TYPE_VOCAB, HIDDEN)),
        "emb_ln_g": jnp.ones((1, HIDDEN), jnp.float32),
        "emb_ln_b": jnp.zeros((1, HIDDEN), jnp.float32),
    }
    wqkv, wo, w1, w2 = [], [], [], []
    for _ in range(LAYERS):
        wq, wk, wv = (nrm(next(keys), (HIDDEN, HIDDEN)) for _ in range(3))
        wqkv.append(jnp.concatenate([wq, wk, wv], axis=1))      # fused QKV weight
        wo.append(nrm(next(keys), (HIDDEN, HIDDEN)))
        w1.append(nrm(next(keys), (HIDDEN, FFN)))
        w2.append(nrm(next(keys), (FFN, HIDDEN)))
    params.update({
        # MXU matmul weights stored bf16 (f32 accumulation in-kernel).
        "wqkv": jnp.stack(wqkv).astype(jnp.bfloat16),               # (L, H, 3H)
        "bqkv": jnp.zeros((LAYERS, 1, 3 * HIDDEN), jnp.float32),
        "wo": jnp.stack(wo).astype(jnp.bfloat16),
        "bo": jnp.zeros((LAYERS, 1, HIDDEN), jnp.float32),
        "ln1_g": jnp.ones((LAYERS, 1, HIDDEN), jnp.float32),
        "ln1_b": jnp.zeros((LAYERS, 1, HIDDEN), jnp.float32),
        "w1": jnp.stack(w1).astype(jnp.bfloat16),
        "b1": jnp.zeros((LAYERS, 1, FFN), jnp.float32),
        "w2": jnp.stack(w2).astype(jnp.bfloat16),
        "b2": jnp.zeros((LAYERS, 1, HIDDEN), jnp.float32),
        "ln2_g": jnp.ones((LAYERS, 1, HIDDEN), jnp.float32),
        "ln2_b": jnp.zeros((LAYERS, 1, HIDDEN), jnp.float32),
        # classifier padded to 128 lanes; wrapper slices the first NUM_LABELS
        "cls_w": jnp.zeros((HIDDEN, LANE), jnp.float32).at[:, :NUM_LABELS].set(
            nrm(next(keys), (HIDDEN, NUM_LABELS))).astype(jnp.bfloat16),
        "cls_b": jnp.zeros((1, LANE), jnp.float32),
    })
    return params


# ---------------- forward (== GatorTronWithClassifier.forward) ----------------

def gatortron_with_classifier(params, input_ids, attention_mask=None, token_type_ids=None):
    B, S = input_ids.shape
    if attention_mask is None:
        attention_mask = jnp.ones((B, S), jnp.float32)
    if token_type_ids is None:
        token_type_ids = jnp.zeros((B, S), jnp.int32)

    # --- embeddings (gathers are plain-JAX glue) ---
    pos_ids = jnp.arange(S)
    emb = (params["word_emb"][input_ids]
           + params["pos_emb"][pos_ids][None, :, :]
           + params["type_emb"][token_type_ids]).reshape(B * S, HIDDEN).astype(jnp.float32)

    # Per-batch additive key bias, (B, 1, S): 0 where the key is attended, else -1e9.
    # (No (B*S)^2 materialization; attention is computed per batch in-kernel.)
    key_bias = jnp.where(attention_mask.astype(jnp.float32) > 0.5, 0.0, -1e9)
    key_bias = key_bias.astype(jnp.float32).reshape(B, 1, S)

    inv = lambda shape: pl.BlockSpec(shape, lambda b, _s=shape: (0,) * len(_s))

    # TODO(synk): at real GatorTron sizes (hidden~2560, ffn~10240, seq~512) the
    # full-slab weight BlockSpecs must become K/N-tiled grids (256-multiple
    # tiles on v6e/v7x, 128 on v5e) with VMEM f32 accumulators.
    logits_all = pl.pallas_call(
        _encoder_kernel,
        out_shape=jax.ShapeDtypeStruct((B, 1, LANE), jnp.float32),
        grid=(B,),
        in_specs=[
            pl.BlockSpec((S, HIDDEN), lambda b: (b, 0)),            # per-batch embedded tokens
            pl.BlockSpec((1, 1, S), lambda b: (b, 0, 0)),           # per-batch key bias
            inv((1, HIDDEN)), inv((1, HIDDEN)),                     # embedding LN
            inv((LAYERS, HIDDEN, 3 * HIDDEN)), inv((LAYERS, 1, 3 * HIDDEN)),  # fused QKV
            inv((LAYERS, HIDDEN, HIDDEN)), inv((LAYERS, 1, HIDDEN)),          # attn out proj
            inv((LAYERS, 1, HIDDEN)), inv((LAYERS, 1, HIDDEN)),               # LN1
            inv((LAYERS, HIDDEN, FFN)), inv((LAYERS, 1, FFN)),                # FFN in
            inv((LAYERS, FFN, HIDDEN)), inv((LAYERS, 1, HIDDEN)),             # FFN out
            inv((LAYERS, 1, HIDDEN)), inv((LAYERS, 1, HIDDEN)),               # LN2
            inv((HIDDEN, LANE)), inv((1, LANE)),                              # classifier (padded)
        ],
        out_specs=pl.BlockSpec((1, 1, LANE), lambda b: (b, 0, 0)),
        compiler_params=pltpu.CompilerParams(
            dimension_semantics=("parallel",)),   # batch axis -> megacore-shardable
    )(emb, key_bias,
      params["emb_ln_g"], params["emb_ln_b"],
      params["wqkv"], params["bqkv"], params["wo"], params["bo"],
      params["ln1_g"], params["ln1_b"],
      params["w1"], params["b1"], params["w2"], params["b2"],
      params["ln2_g"], params["ln2_b"],
      params["cls_w"], params["cls_b"])

    # outputs.last_hidden_state[:, 0, :] -> dropout (identity) -> classifier
    return logits_all.reshape(B, LANE)[:, :NUM_LABELS]


if __name__ == "__main__":
    key = jax.random.PRNGKey(0)
    pkey, ikey = jax.random.split(key)
    params = init_params(pkey)

    B, S = 2, 8
    input_ids = jax.random.randint(ikey, (B, S), 0, VOCAB)
    attention_mask = jnp.ones((B, S), jnp.float32).at[1, 6:].set(0.0)
    token_type_ids = jnp.zeros((B, S), jnp.int32)

    fwd = jax.jit(gatortron_with_classifier)
    logits = fwd(params, input_ids, attention_mask, token_type_ids)
    logits = jax.block_until_ready(logits)
    assert logits.shape == (B, NUM_LABELS) and logits.dtype == jnp.float32
    print("KERNEL_OK")
</pallas_src>

<mosaic_0001>
module attributes {stable_mosaic.version = 11 : i64} {
  func.func @_encoder_kernel(%arg0: i32, %arg1: memref<8x32xf32, #tpu.memory_space<vmem>>, %arg2: memref<1x1x8xf32, #tpu.memory_space<vmem>>, %arg3: memref<1x32xf32, #tpu.memory_space<vmem>>, %arg4: memref<1x32xf32, #tpu.memory_space<vmem>>, %arg5: memref<2x32x96xbf16, #tpu.memory_space<vmem>>, %arg6: memref<2x1x96xf32, #tpu.memory_space<vmem>>, %arg7: memref<2x32x32xbf16, #tpu.memory_space<vmem>>, %arg8: memref<2x1x32xf32, #tpu.memory_space<vmem>>, %arg9: memref<2x1x32xf32, #tpu.memory_space<vmem>>, %arg10: memref<2x1x32xf32, #tpu.memory_space<vmem>>, %arg11: memref<2x32x64xbf16, #tpu.memory_space<vmem>>, %arg12: memref<2x1x64xf32, #tpu.memory_space<vmem>>, %arg13: memref<2x64x32xbf16, #tpu.memory_space<vmem>>, %arg14: memref<2x1x32xf32, #tpu.memory_space<vmem>>, %arg15: memref<2x1x32xf32, #tpu.memory_space<vmem>>, %arg16: memref<2x1x32xf32, #tpu.memory_space<vmem>>, %arg17: memref<32x128xbf16, #tpu.memory_space<vmem>>, %arg18: memref<1x128xf32, #tpu.memory_space<vmem>>, %arg19: memref<1x1x128xf32, #tpu.memory_space<vmem>>) attributes {dimension_semantics = [#tpu.dimension_semantics<parallel>], iteration_bounds = array<i64: 2>, scalar_prefetch = 0 : i64, scratch_operands = 0 : i64, tpu.core_type = #tpu.core_type<tc>, window_params = [{transform_indices = @transform_0, window_bounds = array<i64: 8, 32>}, {transform_indices = @transform_1, window_bounds = array<i64: 1, 1, 8>}, {pipeline_mode = #tpu.pipeline_mode<synchronous>, transform_indices = @transform_2, window_bounds = array<i64: 1, 32>}, {pipeline_mode = #tpu.pipeline_mode<synchronous>, transform_indices = @transform_3, window_bounds = array<i64: 1, 32>}, {pipeline_mode = #tpu.pipeline_mode<synchronous>, transform_indices = @transform_4, window_bounds = array<i64: 2, 32, 96>}, {pipeline_mode = #tpu.pipeline_mode<synchronous>, transform_indices = @transform_5, window_bounds = array<i64: 2, 1, 96>}, {pipeline_mode = #tpu.pipeline_mode<synchronous>, transform_indices = @transform_6, window_bounds = array<i64: 2, 32, 32>}, {pipeline_mode = #tpu.pipeline_mode<synchronous>, transform_indices = @transform_7, window_bounds = array<i64: 2, 1, 32>}, {pipeline_mode = #tpu.pipeline_mode<synchronous>, transform_indices = @transform_8, window_bounds = array<i64: 2, 1, 32>}, {pipeline_mode = #tpu.pipeline_mode<synchronous>, transform_indices = @transform_9, window_bounds = array<i64: 2, 1, 32>}, {pipeline_mode = #tpu.pipeline_mode<synchronous>, transform_indices = @transform_10, window_bounds = array<i64: 2, 32, 64>}, {pipeline_mode = #tpu.pipeline_mode<synchronous>, transform_indices = @transform_11, window_bounds = array<i64: 2, 1, 64>}, {pipeline_mode = #tpu.pipeline_mode<synchronous>, transform_indices = @transform_12, window_bounds = array<i64: 2, 64, 32>}, {pipeline_mode = #tpu.pipeline_mode<synchronous>, transform_indices = @transform_13, window_bounds = array<i64: 2, 1, 32>}, {pipeline_mode = #tpu.pipeline_mode<synchronous>, transform_indices = @transform_14, window_bounds = array<i64: 2, 1, 32>}, {pipeline_mode = #tpu.pipeline_mode<synchronous>, transform_indices = @transform_15, window_bounds = array<i64: 2, 1, 32>}, {pipeline_mode = #tpu.pipeline_mode<synchronous>, transform_indices = @transform_16, window_bounds = array<i64: 32, 128>}, {pipeline_mode = #tpu.pipeline_mode<synchronous>, transform_indices = @transform_17, window_bounds = array<i64: 1, 128>}, {transform_indices = @transform_18, window_bounds = array<i64: 1, 1, 128>}]} {
    %c0 = arith.constant 0 : index
    %c0_0 = arith.constant 0 : index
    %0 = vector.load %arg1[%c0, %c0_0] : memref<8x32xf32, #tpu.memory_space<vmem>>, vector<8x32xf32>
    %c0_1 = arith.constant 0 : index
    %c0_2 = arith.constant 0 : index
    %1 = vector.load %arg3[%c0_1, %c0_2] : memref<1x32xf32, #tpu.memory_space<vmem>>, vector<1x32xf32>
    %c0_3 = arith.constant 0 : index
    %c0_4 = arith.constant 0 : index
    %2 = vector.load %arg4[%c0_3, %c0_4] : memref<1x32xf32, #tpu.memory_space<vmem>>, vector<1x32xf32>
    %cst = arith.constant dense<0.000000e+00> : vector<8xf32>
    %3 = vector.multi_reduction <add>, %0, %cst [1] : vector<8x32xf32> to vector<8xf32>
    %4 = vector.shape_cast %3 : vector<8xf32> to vector<8x1xf32>
    %cst_5 = arith.constant 3.200000e+01 : f32
    %5 = vector.broadcast %cst_5 : f32 to vector<8x1xf32>
    %6 = arith.divf %4, %5 : vector<8x1xf32>
    %7 = vector.broadcast %6 : vector<8x1xf32> to vector<8x32xf32>
    %8 = arith.subf %0, %7 : vector<8x32xf32>
    %9 = arith.mulf %8, %8 : vector<8x32xf32>
    %cst_6 = arith.constant dense<0.000000e+00> : vector<8xf32>
    %10 = vector.multi_reduction <add>, %9, %cst_6 [1] : vector<8x32xf32> to vector<8xf32>
    %11 = vector.shape_cast %10 : vector<8xf32> to vector<8x1xf32>
    %cst_7 = arith.constant 3.200000e+01 : f32
    %12 = vector.broadcast %cst_7 : f32 to vector<8x1xf32>
    %13 = arith.divf %11, %12 : vector<8x1xf32>
    %14 = vector.broadcast %6 : vector<8x1xf32> to vector<8x32xf32>
    %15 = arith.subf %0, %14 : vector<8x32xf32>
    %cst_8 = arith.constant 9.99999996E-13 : f32
    %16 = vector.broadcast %cst_8 : f32 to vector<8x1xf32>
    %17 = arith.addf %13, %16 : vector<8x1xf32>
    %18 = math.rsqrt %17 : vector<8x1xf32>
    %19 = vector.broadcast %18 : vector<8x1xf32> to vector<8x32xf32>
    %20 = arith.mulf %15, %19 : vector<8x32xf32>
    %21 = vector.broadcast %1 : vector<1x32xf32> to vector<8x32xf32>
    %22 = arith.mulf %20, %21 : vector<8x32xf32>
    %23 = vector.broadcast %2 : vector<1x32xf32> to vector<8x32xf32>
    %24 = arith.addf %22, %23 : vector<8x32xf32>
    %c0_9 = arith.constant 0 : index
    %c0_10 = arith.constant 0 : index
    %c0_11 = arith.constant 0 : index
    %25 = vector.load %arg2[%c0_9, %c0_10, %c0_11] : memref<1x1x8xf32, #tpu.memory_space<vmem>>, vector<1x1x8xf32>
    %26 = vector.shape_cast %25 : vector<1x1x8xf32> to vector<1x8xf32>
    %27 = arith.truncf %24 : vector<8x32xf32> to vector<8x32xbf16>
    %c0_12 = arith.constant 0 : index
    %c0_13 = arith.constant 0 : index
    %c0_14 = arith.constant 0 : index
    %28 = vector.load %arg5[%c0_12, %c0_13, %c0_14] : memref<2x32x96xbf16, #tpu.memory_space<vmem>>, vector<1x32x96xbf16>
    %29 = vector.shape_cast %28 : vector<1x32x96xbf16> to vector<32x96xbf16>
    %cst_15 = arith.constant dense<0.000000e+00> : vector<8x96xf32>
    %30 = tpu.matmul %27, %29, %cst_15 {dimension_numbers = #tpu.dot_dimension_numbers<[1], [0], [0], [1], [0, 0, 1, 1], [], []>} : vector<8x32xbf16>, vector<32x96xbf16>, vector<8x96xf32> -> vector<8x96xf32>
    %c0_16 = arith.constant 0 : index
    %c0_17 = arith.constant 0 : index
    %c0_18 = arith.constant 0 : index
    %31 = vector.load %arg6[%c0_16, %c0_17, %c0_18] : memref<2x1x96xf32, #tpu.memory_space<vmem>>, vector<1x1x96xf32>
    %32 = vector.shape_cast %31 : vector<1x1x96xf32> to vector<1x96xf32>
    %33 = vector.broadcast %32 : vector<1x96xf32> to vector<8x96xf32>
    %34 = arith.addf %30, %33 : vector<8x96xf32>
    %c0_19 = arith.constant 0 : index
    %c0_20 = arith.constant 0 : index
    %c0_21 = arith.constant 0 : index
    %35 = vector.load %arg7[%c0_19, %c0_20, %c0_21] : memref<2x32x32xbf16, #tpu.memory_space<vmem>>, vector<1x32x32xbf16>
    %36 = vector.shape_cast %35 : vector<1x32x32xbf16> to vector<32x32xbf16>
    %37 = vector.extract_strided_slice %34 {offsets = [0, 0], sizes = [8, 16], strides = [1, 1]} : vector<8x96xf32> to vector<8x16xf32>
    %38 = arith.truncf %37 : vector<8x16xf32> to vector<8x16xbf16>
    %39 = vector.extract_strided_slice %34 {offsets = [0, 32], sizes = [8, 16], strides = [1, 1]} : vector<8x96xf32> to vector<8x16xf32>
    %40 = arith.truncf %39 : vector<8x16xf32> to vector<8x16xbf16>
    %41 = vector.extract_strided_slice %34 {offsets = [0, 64], sizes = [8, 16], strides = [1, 1]} : vector<8x96xf32> to vector<8x16xf32>
    %42 = arith.truncf %41 : vector<8x16xf32> to vector<8x16xbf16>
    %43 = tpu.transpose %40, [1, 0] : vector<8x16xbf16> -> vector<16x8xbf16>
    %cst_22 = arith.constant dense<0.000000e+00> : vector<8x8xf32>
    %44 = tpu.matmul %38, %43, %cst_22 {dimension_numbers = #tpu.dot_dimension_numbers<[1], [0], [0], [1], [0, 0, 1, 1], [], []>} : vector<8x16xbf16>, vector<16x8xbf16>, vector<8x8xf32> -> vector<8x8xf32>
    %cst_23 = arith.constant 2.500000e-01 : f32
    %45 = vector.broadcast %cst_23 : f32 to vector<8x8xf32>
    %46 = arith.mulf %44, %45 : vector<8x8xf32>
    %47 = vector.broadcast %26 : vector<1x8xf32> to vector<8x8xf32>
    %48 = arith.addf %46, %47 : vector<8x8xf32>
    %cst_24 = arith.constant dense<0xFF800000> : vector<8xf32>
    %49 = vector.multi_reduction <maximumf>, %48, %cst_24 [1] : vector<8x8xf32> to vector<8xf32>
    %50 = vector.shape_cast %49 : vector<8xf32> to vector<8x1xf32>
    %51 = vector.broadcast %50 : vector<8x1xf32> to vector<8x8xf32>
    %52 = arith.subf %48, %51 : vector<8x8xf32>
    %53 = math.exp %52 : vector<8x8xf32>
    %cst_25 = arith.constant dense<0.000000e+00> : vector<8xf32>
    %54 = vector.multi_reduction <add>, %53, %cst_25 [1] : vector<8x8xf32> to vector<8xf32>
    %55 = vector.shape_cast %54 : vector<8xf32> to vector<8x1xf32>
    %56 = tpu.reciprocal %55 {approx = true} : vector<8x1xf32> -> vector<8x1xf32>
    %57 = vector.broadcast %56 : vector<8x1xf32> to vector<8x8xf32>
    %58 = arith.mulf %53, %57 : vector<8x8xf32>
    %59 = arith.truncf %58 : vector<8x8xf32> to vector<8x8xbf16>
    %cst_26 = arith.constant dense<0.000000e+00> : vector<8x16xf32>
    %60 = tpu.matmul %59, %42, %cst_26 {dimension_numbers = #tpu.dot_dimension_numbers<[1], [0], [0], [1], [0, 0, 1, 1], [], []>} : vector<8x8xbf16>, vector<8x16xbf16>, vector<8x16xf32> -> vector<8x16xf32>
    %61 = arith.truncf %60 : vector<8x16xf32> to vector<8x16xbf16>
    %62 = vector.extract_strided_slice %36 {offsets = [0, 0], sizes = [16, 32], strides = [1, 1]} : vector<32x32xbf16> to vector<16x32xbf16>
    %cst_27 = arith.constant dense<0.000000e+00> : vector<8x32xf32>
    %63 = tpu.matmul %61, %62, %cst_27 {dimension_numbers = #tpu.dot_dimension_numbers<[1], [0], [0], [1], [0, 0, 1, 1], [], []>} : vector<8x16xbf16>, vector<16x32xbf16>, vector<8x32xf32> -> vector<8x32xf32>
    %64 = vector.extract_strided_slice %34 {offsets = [0, 16], sizes = [8, 16], strides = [1, 1]} : vector<8x96xf32> to vector<8x16xf32>
    %65 = arith.truncf %64 : vector<8x16xf32> to vector<8x16xbf16>
    %66 = vector.extract_strided_slice %34 {offsets = [0, 48], sizes = [8, 16], strides = [1, 1]} : vector<8x96xf32> to vector<8x16xf32>
    %67 = arith.truncf %66 : vector<8x16xf32> to vector<8x16xbf16>
    %68 = vector.extract_strided_slice %34 {offsets = [0, 80], sizes = [8, 16], strides = [1, 1]} : vector<8x96xf32> to vector<8x16xf32>
    %69 = arith.truncf %68 : vector<8x16xf32> to vector<8x16xbf16>
    %70 = tpu.transpose %67, [1, 0] : vector<8x16xbf16> -> vector<16x8xbf16>
    %cst_28 = arith.constant dense<0.000000e+00> : vector<8x8xf32>
    %71 = tpu.matmul %65, %70, %cst_28 {dimension_numbers = #tpu.dot_dimension_numbers<[1], [0], [0], [1], [0, 0, 1, 1], [], []>} : vector<8x16xbf16>, vector<16x8xbf16>, vector<8x8xf32> -> vector<8x8xf32>
    %cst_29 = arith.constant 2.500000e-01 : f32
    %72 = vector.broadcast %cst_29 : f32 to vector<8x8xf32>
    %73 = arith.mulf %71, %72 : vector<8x8xf32>
    %74 = vector.broadcast %26 : vector<1x8xf32> to vector<8x8xf32>
    %75 = arith.addf %73, %74 : vector<8x8xf32>
    %cst_30 = arith.constant dense<0xFF800000> : vector<8xf32>
    %76 = vector.multi_reduction <maximumf>, %75, %cst_30 [1] : vector<8x8xf32> to vector<8xf32>
    %77 = vector.shape_cast %76 : vector<8xf32> to vector<8x1xf32>
    %78 = vector.broadcast %77 : vector<8x1xf32> to vector<8x8xf32>
    %79 = arith.subf %75, %78 : vector<8x8xf32>
    %80 = math.exp %79 : vector<8x8xf32>
    %cst_31 = arith.constant dense<0.000000e+00> : vector<8xf32>
    %81 = vector.multi_reduction <add>, %80, %cst_31 [1] : vector<8x8xf32> to vector<8xf32>
    %82 = vector.shape_cast %81 : vector<8xf32> to vector<8x1xf32>
    %83 = tpu.reciprocal %82 {approx = true} : vector<8x1xf32> -> vector<8x1xf32>
    %84 = vector.broadcast %83 : vector<8x1xf32> to vector<8x8xf32>
    %85 = arith.mulf %80, %84 : vector<8x8xf32>
    %86 = arith.truncf %85 : vector<8x8xf32> to vector<8x8xbf16>
    %cst_32 = arith.constant dense<0.000000e+00> : vector<8x16xf32>
    %87 = tpu.matmul %86, %69, %cst_32 {dimension_numbers = #tpu.dot_dimension_numbers<[1], [0], [0], [1], [0, 0, 1, 1], [], []>} : vector<8x8xbf16>, vector<8x16xbf16>, vector<8x16xf32> -> vector<8x16xf32>
    %88 = arith.truncf %87 : vector<8x16xf32> to vector<8x16xbf16>
    %89 = vector.extract_strided_slice %36 {offsets = [16, 0], sizes = [16, 32], strides = [1, 1]} : vector<32x32xbf16> to vector<16x32xbf16>
    %cst_33 = arith.constant dense<0.000000e+00> : vector<8x32xf32>
    %90 = tpu.matmul %88, %89, %cst_33 {dimension_numbers = #tpu.dot_dimension_numbers<[1], [0], [0], [1], [0, 0, 1, 1], [], []>} : vector<8x16xbf16>, vector<16x32xbf16>, vector<8x32xf32> -> vector<8x32xf32>
    %91 = arith.addf %63, %90 : vector<8x32xf32>
    %c0_34 = arith.constant 0 : index
    %c0_35 = arith.constant 0 : index
    %c0_36 = arith.constant 0 : index
    %92 = vector.load %arg8[%c0_34, %c0_35, %c0_36] : memref<2x1x32xf32, #tpu.memory_space<vmem>>, vector<1x1x32xf32>
    %93 = vector.shape_cast %92 : vector<1x1x32xf32> to vector<1x32xf32>
    %94 = vector.broadcast %93 : vector<1x32xf32> to vector<8x32xf32>
    %95 = arith.addf %91, %94 : vector<8x32xf32>
    %96 = arith.addf %95, %24 : vector<8x32xf32>
    %c0_37 = arith.constant 0 : index
    %c0_38 = arith.constant 0 : index
    %c0_39 = arith.constant 0 : index
    %97 = vector.load %arg9[%c0_37, %c0_38, %c0_39] : memref<2x1x32xf32, #tpu.memory_space<vmem>>, vector<1x1x32xf32>
    %98 = vector.shape_cast %97 : vector<1x1x32xf32> to vector<1x32xf32>
    %c0_40 = arith.constant 0 : index
    %c0_41 = arith.constant 0 : index
    %c0_42 = arith.constant 0 : index
    %99 = vector.load %arg10[%c0_40, %c0_41, %c0_42] : memref<2x1x32xf32, #tpu.memory_space<vmem>>, vector<1x1x32xf32>
    %100 = vector.shape_cast %99 : vector<1x1x32xf32> to vector<1x32xf32>
    %cst_43 = arith.constant dense<0.000000e+00> : vector<8xf32>
    %101 = vector.multi_reduction <add>, %96, %cst_43 [1] : vector<8x32xf32> to vector<8xf32>
    %102 = vector.shape_cast %101 : vector<8xf32> to vector<8x1xf32>
    %cst_44 = arith.constant 3.200000e+01 : f32
    %103 = vector.broadcast %cst_44 : f32 to vector<8x1xf32>
    %104 = arith.divf %102, %103 : vector<8x1xf32>
    %105 = vector.broadcast %104 : vector<8x1xf32> to vector<8x32xf32>
    %106 = arith.subf %96, %105 : vector<8x32xf32>
    %107 = arith.mulf %106, %106 : vector<8x32xf32>
    %cst_45 = arith.constant dense<0.000000e+00> : vector<8xf32>
    %108 = vector.multi_reduction <add>, %107, %cst_45 [1] : vector<8x32xf32> to vector<8xf32>
    %109 = vector.shape_cast %108 : vector<8xf32> to vector<8x1xf32>
    %cst_46 = arith.constant 3.200000e+01 : f32
    %110 = vector.broadcast %cst_46 : f32 to vector<8x1xf32>
    %111 = arith.divf %109, %110 : vector<8x1xf32>
    %112 = vector.broadcast %104 : vector<8x1xf32> to vector<8x32xf32>
    %113 = arith.subf %96, %112 : vector<8x32xf32>
    %cst_47 = arith.constant 9.99999996E-13 : f32
    %114 = vector.broadcast %cst_47 : f32 to vector<8x1xf32>
    %115 = arith.addf %111, %114 : vector<8x1xf32>
    %116 = math.rsqrt %115 : vector<8x1xf32>
    %117 = vector.broadcast %116 : vector<8x1xf32> to vector<8x32xf32>
    %118 = arith.mulf %113, %117 : vector<8x32xf32>
    %119 = vector.broadcast %98 : vector<1x32xf32> to vector<8x32xf32>
    %120 = arith.mulf %118, %119 : vector<8x32xf32>
    %121 = vector.broadcast %100 : vector<1x32xf32> to vector<8x32xf32>
    %122 = arith.addf %120, %121 : vector<8x32xf32>
    %123 = arith.truncf %122 : vector<8x32xf32> to vector<8x32xbf16>
    %c0_48 = arith.constant 0 : index
    %c0_49 = arith.constant 0 : index
    %c0_50 = arith.constant 0 : index
    %124 = vector.load %arg11[%c0_48, %c0_49, %c0_50] : memref<2x32x64xbf16, #tpu.memory_space<vmem>>, vector<1x32x64xbf16>
    %125 = vector.shape_cast %124 : vector<1x32x64xbf16> to vector<32x64xbf16>
    %cst_51 = arith.constant dense<0.000000e+00> : vector<8x64xf32>
    %126 = tpu.matmul %123, %125, %cst_51 {dimension_numbers = #tpu.dot_dimension_numbers<[1], [0], [0], [1], [0, 0, 1, 1], [], []>} : vector<8x32xbf16>, vector<32x64xbf16>, vector<8x64xf32> -> vector<8x64xf32>
    %c0_52 = arith.constant 0 : index
    %c0_53 = arith.constant 0 : index
    %c0_54 = arith.constant 0 : index
    %127 = vector.load %arg12[%c0_52, %c0_53, %c0_54] : memref<2x1x64xf32, #tpu.memory_space<vmem>>, vector<1x1x64xf32>
    %128 = vector.shape_cast %127 : vector<1x1x64xf32> to vector<1x64xf32>
    %129 = vector.broadcast %128 : vector<1x64xf32> to vector<8x64xf32>
    %130 = arith.addf %126, %129 : vector<8x64xf32>
    %131 = arith.mulf %130, %130 : vector<8x64xf32>
    %132 = arith.mulf %130, %131 : vector<8x64xf32>
    %cst_55 = arith.constant 4.471500e-02 : f32
    %133 = vector.broadcast %cst_55 : f32 to vector<8x64xf32>
    %134 = arith.mulf %133, %132 : vector<8x64xf32>
    %135 = arith.addf %130, %134 : vector<8x64xf32>
    %cst_56 = arith.constant 0.797884583 : f32
    %136 = vector.broadcast %cst_56 : f32 to vector<8x64xf32>
    %137 = arith.mulf %136, %135 : vector<8x64xf32>
    %138 = math.tanh %137 : vector<8x64xf32>
    %cst_57 = arith.constant 1.000000e+00 : f32
    %139 = vector.broadcast %cst_57 : f32 to vector<8x64xf32>
    %140 = arith.addf %139, %138 : vector<8x64xf32>
    %cst_58 = arith.constant 5.000000e-01 : f32
    %141 = vector.broadcast %cst_58 : f32 to vector<8x64xf32>
    %142 = arith.mulf %141, %140 : vector<8x64xf32>
    %143 = arith.mulf %130, %142 : vector<8x64xf32>
    %144 = arith.truncf %143 : vector<8x64xf32> to vector<8x64xbf16>
    %c0_59 = arith.constant 0 : index
    %c0_60 = arith.constant 0 : index
    %c0_61 = arith.constant 0 : index
    %145 = vector.load %arg13[%c0_59, %c0_60, %c0_61] : memref<2x64x32xbf16, #tpu.memory_space<vmem>>, vector<1x64x32xbf16>
    %146 = vector.shape_cast %145 : vector<1x64x32xbf16> to vector<64x32xbf16>
    %cst_62 = arith.constant dense<0.000000e+00> : vector<8x32xf32>
    %147 = tpu.matmul %144, %146, %cst_62 {dimension_numbers = #tpu.dot_dimension_numbers<[1], [0], [0], [1], [0, 0, 1, 1], [], []>} : vector<8x64xbf16>, vector<64x32xbf16>, vector<8x32xf32> -> vector<8x32xf32>
    %c0_63 = arith.constant 0 : index
    %c0_64 = arith.constant 0 : index
    %c0_65 = arith.constant 0 : index
    %148 = vector.load %arg14[%c0_63, %c0_64, %c0_65] : memref<2x1x32xf32, #tpu.memory_space<vmem>>, vector<1x1x32xf32>
    %149 = vector.shape_cast %148 : vector<1x1x32xf32> to vector<1x32xf32>
    %150 = vector.broadcast %149 : vector<1x32xf32> to vector<8x32xf32>
    %151 = arith.addf %147, %150 : vector<8x32xf32>
    %152 = arith.addf %151, %122 : vector<8x32xf32>
    %c0_66 = arith.constant 0 : index
    %c0_67 = arith.constant 0 : index
    %c0_68 = arith.constant 0 : index
    %153 = vector.load %arg15[%c0_66, %c0_67, %c0_68] : memref<2x1x32xf32, #tpu.memory_space<vmem>>, vector<1x1x32xf32>
    %154 = vector.shape_cast %153 : vector<1x1x32xf32> to vector<1x32xf32>
    %c0_69 = arith.constant 0 : index
    %c0_70 = arith.constant 0 : index
    %c0_71 = arith.constant 0 : index
    %155 = vector.load %arg16[%c0_69, %c0_70, %c0_71] : memref<2x1x32xf32, #tpu.memory_space<vmem>>, vector<1x1x32xf32>
    %156 = vector.shape_cast %155 : vector<1x1x32xf32> to vector<1x32xf32>
    %cst_72 = arith.constant dense<0.000000e+00> : vector<8xf32>
    %157 = vector.multi_reduction <add>, %152, %cst_72 [1] : vector<8x32xf32> to vector<8xf32>
    %158 = vector.shape_cast %157 : vector<8xf32> to vector<8x1xf32>
    %cst_73 = arith.constant 3.200000e+01 : f32
    %159 = vector.broadcast %cst_73 : f32 to vector<8x1xf32>
    %160 = arith.divf %158, %159 : vector<8x1xf32>
    %161 = vector.broadcast %160 : vector<8x1xf32> to vector<8x32xf32>
    %162 = arith.subf %152, %161 : vector<8x32xf32>
    %163 = arith.mulf %162, %162 : vector<8x32xf32>
    %cst_74 = arith.constant dense<0.000000e+00> : vector<8xf32>
    %164 = vector.multi_reduction <add>, %163, %cst_74 [1] : vector<8x32xf32> to vector<8xf32>
    %165 = vector.shape_cast %164 : vector<8xf32> to vector<8x1xf32>
    %cst_75 = arith.constant 3.200000e+01 : f32
    %166 = vector.broadcast %cst_75 : f32 to vector<8x1xf32>
    %167 = arith.divf %165, %166 : vector<8x1xf32>
    %168 = vector.broadcast %160 : vector<8x1xf32> to vector<8x32xf32>
    %169 = arith.subf %152, %168 : vector<8x32xf32>
    %cst_76 = arith.constant 9.99999996E-13 : f32
    %170 = vector.broadcast %cst_76 : f32 to vector<8x1xf32>
    %171 = arith.addf %167, %170 : vector<8x1xf32>
    %172 = math.rsqrt %171 : vector<8x1xf32>
    %173 = vector.broadcast %172 : vector<8x1xf32> to vector<8x32xf32>
    %174 = arith.mulf %169, %173 : vector<8x32xf32>
    %175 = vector.broadcast %154 : vector<1x32xf32> to vector<8x32xf32>
    %176 = arith.mulf %174, %175 : vector<8x32xf32>
    %177 = vector.broadcast %156 : vector<1x32xf32> to vector<8x32xf32>
    %178 = arith.addf %176, %177 : vector<8x32xf32>
    %179 = arith.truncf %178 : vector<8x32xf32> to vector<8x32xbf16>
    %c1 = arith.constant 1 : index
    %c0_77 = arith.constant 0 : index
    %c0_78 = arith.constant 0 : index
    %180 = vector.load %arg5[%c1, %c0_77, %c0_78] : memref<2x32x96xbf16, #tpu.memory_space<vmem>>, vector<1x32x96xbf16>
    %181 = vector.shape_cast %180 : vector<1x32x96xbf16> to vector<32x96xbf16>
    %cst_79 = arith.constant dense<0.000000e+00> : vector<8x96xf32>
    %182 = tpu.matmul %179, %181, %cst_79 {dimension_numbers = #tpu.dot_dimension_numbers<[1], [0], [0], [1], [0, 0, 1, 1], [], []>} : vector<8x32xbf16>, vector<32x96xbf16>, vector<8x96xf32> -> vector<8x96xf32>
    %c1_80 = arith.constant 1 : index
    %c0_81 = arith.constant 0 : index
    %c0_82 = arith.constant 0 : index
    %183 = vector.load %arg6[%c1_80, %c0_81, %c0_82] : memref<2x1x96xf32, #tpu.memory_space<vmem>>, vector<1x1x96xf32>
    %184 = vector.shape_cast %183 : vector<1x1x96xf32> to vector<1x96xf32>
    %185 = vector.broadcast %184 : vector<1x96xf32> to vector<8x96xf32>
    %186 = arith.addf %182, %185 : vector<8x96xf32>
    %c1_83 = arith.constant 1 : index
    %c0_84 = arith.constant 0 : index
    %c0_85 = arith.constant 0 : index
    %187 = vector.load %arg7[%c1_83, %c0_84, %c0_85] : memref<2x32x32xbf16, #tpu.memory_space<vmem>>, vector<1x32x32xbf16>
    %188 = vector.shape_cast %187 : vector<1x32x32xbf16> to vector<32x32xbf16>
    %189 = vector.extract_strided_slice %186 {offsets = [0, 0], sizes = [8, 16], strides = [1, 1]} : vector<8x96xf32> to vector<8x16xf32>
    %190 = arith.truncf %189 : vector<8x16xf32> to vector<8x16xbf16>
    %191 = vector.extract_strided_slice %186 {offsets = [0, 32], sizes = [8, 16], strides = [1, 1]} : vector<8x96xf32> to vector<8x16xf32>
    %192 = arith.truncf %191 : vector<8x16xf32> to vector<8x16xbf16>
    %193 = vector.extract_strided_slice %186 {offsets = [0, 64], sizes = [8, 16], strides = [1, 1]} : vector<8x96xf32> to vector<8x16xf32>
    %194 = arith.truncf %193 : vector<8x16xf32> to vector<8x16xbf16>
    %195 = tpu.transpose %192, [1, 0] : vector<8x16xbf16> -> vector<16x8xbf16>
    %cst_86 = arith.constant dense<0.000000e+00> : vector<8x8xf32>
    %196 = tpu.matmul %190, %195, %cst_86 {dimension_numbers = #tpu.dot_dimension_numbers<[1], [0], [0], [1], [0, 0, 1, 1], [], []>} : vector<8x16xbf16>, vector<16x8xbf16>, vector<8x8xf32> -> vector<8x8xf32>
    %cst_87 = arith.constant 2.500000e-01 : f32
    %197 = vector.broadcast %cst_87 : f32 to vector<8x8xf32>
    %198 = arith.mulf %196, %197 : vector<8x8xf32>
    %199 = vector.broadcast %26 : vector<1x8xf32> to vector<8x8xf32>
    %200 = arith.addf %198, %199 : vector<8x8xf32>
    %cst_88 = arith.constant dense<0xFF800000> : vector<8xf32>
    %201 = vector.multi_reduction <maximumf>, %200, %cst_88 [1] : vector<8x8xf32> to vector<8xf32>
    %202 = vector.shape_cast %201 : vector<8xf32> to vector<8x1xf32>
    %203 = vector.broadcast %202 : vector<8x1xf32> to vector<8x8xf32>
    %204 = arith.subf %200, %203 : vector<8x8xf32>
    %205 = math.exp %204 : vector<8x8xf32>
    %cst_89 = arith.constant dense<0.000000e+00> : vector<8xf32>
    %206 = vector.multi_reduction <add>, %205, %cst_89 [1] : vector<8x8xf32> to vector<8xf32>
    %207 = vector.shape_cast %206 : vector<8xf32> to vector<8x1xf32>
    %208 = tpu.reciprocal %207 {approx = true} : vector<8x1xf32> -> vector<8x1xf32>
    %209 = vector.broadcast %208 : vector<8x1xf32> to vector<8x8xf32>
    %210 = arith.mulf %205, %209 : vector<8x8xf32>
    %211 = arith.truncf %210 : vector<8x8xf32> to vector<8x8xbf16>
    %cst_90 = arith.constant dense<0.000000e+00> : vector<8x16xf32>
    %212 = tpu.matmul %211, %194, %cst_90 {dimension_numbers = #tpu.dot_dimension_numbers<[1], [0], [0], [1], [0, 0, 1, 1], [], []>} : vector<8x8xbf16>, vector<8x16xbf16>, vector<8x16xf32> -> vector<8x16xf32>
    %213 = arith.truncf %212 : vector<8x16xf32> to vector<8x16xbf16>
    %214 = vector.extract_strided_slice %188 {offsets = [0, 0], sizes = [16, 32], strides = [1, 1]} : vector<32x32xbf16> to vector<16x32xbf16>
    %cst_91 = arith.constant dense<0.000000e+00> : vector<8x32xf32>
    %215 = tpu.matmul %213, %214, %cst_91 {dimension_numbers = #tpu.dot_dimension_numbers<[1], [0], [0], [1], [0, 0, 1, 1], [], []>} : vector<8x16xbf16>, vector<16x32xbf16>, vector<8x32xf32> -> vector<8x32xf32>
    %216 = vector.extract_strided_slice %186 {offsets = [0, 16], sizes = [8, 16], strides = [1, 1]} : vector<8x96xf32> to vector<8x16xf32>
    %217 = arith.truncf %216 : vector<8x16xf32> to vector<8x16xbf16>
    %218 = vector.extract_strided_slice %186 {offsets = [0, 48], sizes = [8, 16], strides = [1, 1]} : vector<8x96xf32> to vector<8x16xf32>
    %219 = arith.truncf %218 : vector<8x16xf32> to vector<8x16xbf16>
    %220 = vector.extract_strided_slice %186 {offsets = [0, 80], sizes = [8, 16], strides = [1, 1]} : vector<8x96xf32> to vector<8x16xf32>
    %221 = arith.truncf %220 : vector<8x16xf32> to vector<8x16xbf16>
    %222 = tpu.transpose %219, [1, 0] : vector<8x16xbf16> -> vector<16x8xbf16>
    %cst_92 = arith.constant dense<0.000000e+00> : vector<8x8xf32>
    %223 = tpu.matmul %217, %222, %cst_92 {dimension_numbers = #tpu.dot_dimension_numbers<[1], [0], [0], [1], [0, 0, 1, 1], [], []>} : vector<8x16xbf16>, vector<16x8xbf16>, vector<8x8xf32> -> vector<8x8xf32>
    %cst_93 = arith.constant 2.500000e-01 : f32
    %224 = vector.broadcast %cst_93 : f32 to vector<8x8xf32>
    %225 = arith.mulf %223, %224 : vector<8x8xf32>
    %226 = vector.broadcast %26 : vector<1x8xf32> to vector<8x8xf32>
    %227 = arith.addf %225, %226 : vector<8x8xf32>
    %cst_94 = arith.constant dense<0xFF800000> : vector<8xf32>
    %228 = vector.multi_reduction <maximumf>, %227, %cst_94 [1] : vector<8x8xf32> to vector<8xf32>
    %229 = vector.shape_cast %228 : vector<8xf32> to vector<8x1xf32>
    %230 = vector.broadcast %229 : vector<8x1xf32> to vector<8x8xf32>
    %231 = arith.subf %227, %230 : vector<8x8xf32>
    %232 = math.exp %231 : vector<8x8xf32>
    %cst_95 = arith.constant dense<0.000000e+00> : vector<8xf32>
    %233 = vector.multi_reduction <add>, %232, %cst_95 [1] : vector<8x8xf32> to vector<8xf32>
    %234 = vector.shape_cast %233 : vector<8xf32> to vector<8x1xf32>
    %235 = tpu.reciprocal %234 {approx = true} : vector<8x1xf32> -> vector<8x1xf32>
    %236 = vector.broadcast %235 : vector<8x1xf32> to vector<8x8xf32>
    %237 = arith.mulf %232, %236 : vector<8x8xf32>
    %238 = arith.truncf %237 : vector<8x8xf32> to vector<8x8xbf16>
    %cst_96 = arith.constant dense<0.000000e+00> : vector<8x16xf32>
    %239 = tpu.matmul %238, %221, %cst_96 {dimension_numbers = #tpu.dot_dimension_numbers<[1], [0], [0], [1], [0, 0, 1, 1], [], []>} : vector<8x8xbf16>, vector<8x16xbf16>, vector<8x16xf32> -> vector<8x16xf32>
    %240 = arith.truncf %239 : vector<8x16xf32> to vector<8x16xbf16>
    %241 = vector.extract_strided_slice %188 {offsets = [16, 0], sizes = [16, 32], strides = [1, 1]} : vector<32x32xbf16> to vector<16x32xbf16>
    %cst_97 = arith.constant dense<0.000000e+00> : vector<8x32xf32>
    %242 = tpu.matmul %240, %241, %cst_97 {dimension_numbers = #tpu.dot_dimension_numbers<[1], [0], [0], [1], [0, 0, 1, 1], [], []>} : vector<8x16xbf16>, vector<16x32xbf16>, vector<8x32xf32> -> vector<8x32xf32>
    %243 = arith.addf %215, %242 : vector<8x32xf32>
    %c1_98 = arith.constant 1 : index
    %c0_99 = arith.constant 0 : index
    %c0_100 = arith.constant 0 : index
    %244 = vector.load %arg8[%c1_98, %c0_99, %c0_100] : memref<2x1x32xf32, #tpu.memory_space<vmem>>, vector<1x1x32xf32>
    %245 = vector.shape_cast %244 : vector<1x1x32xf32> to vector<1x32xf32>
    %246 = vector.broadcast %245 : vector<1x32xf32> to vector<8x32xf32>
    %247 = arith.addf %243, %246 : vector<8x32xf32>
    %248 = arith.addf %247, %178 : vector<8x32xf32>
    %c1_101 = arith.constant 1 : index
    %c0_102 = arith.constant 0 : index
    %c0_103 = arith.constant 0 : index
    %249 = vector.load %arg9[%c1_101, %c0_102, %c0_103] : memref<2x1x32xf32, #tpu.memory_space<vmem>>, vector<1x1x32xf32>
    %250 = vector.shape_cast %249 : vector<1x1x32xf32> to vector<1x32xf32>
    %c1_104 = arith.constant 1 : index
    %c0_105 = arith.constant 0 : index
    %c0_106 = arith.constant 0 : index
    %251 = vector.load %arg10[%c1_104, %c0_105, %c0_106] : memref<2x1x32xf32, #tpu.memory_space<vmem>>, vector<1x1x32xf32>
    %252 = vector.shape_cast %251 : vector<1x1x32xf32> to vector<1x32xf32>
    %cst_107 = arith.constant dense<0.000000e+00> : vector<8xf32>
    %253 = vector.multi_reduction <add>, %248, %cst_107 [1] : vector<8x32xf32> to vector<8xf32>
    %254 = vector.shape_cast %253 : vector<8xf32> to vector<8x1xf32>
    %cst_108 = arith.constant 3.200000e+01 : f32
    %255 = vector.broadcast %cst_108 : f32 to vector<8x1xf32>
    %256 = arith.divf %254, %255 : vector<8x1xf32>
    %257 = vector.broadcast %256 : vector<8x1xf32> to vector<8x32xf32>
    %258 = arith.subf %248, %257 : vector<8x32xf32>
    %259 = arith.mulf %258, %258 : vector<8x32xf32>
    %cst_109 = arith.constant dense<0.000000e+00> : vector<8xf32>
    %260 = vector.multi_reduction <add>, %259, %cst_109 [1] : vector<8x32xf32> to vector<8xf32>
    %261 = vector.shape_cast %260 : vector<8xf32> to vector<8x1xf32>
    %cst_110 = arith.constant 3.200000e+01 : f32
    %262 = vector.broadcast %cst_110 : f32 to vector<8x1xf32>
    %263 = arith.divf %261, %262 : vector<8x1xf32>
    %264 = vector.broadcast %256 : vector<8x1xf32> to vector<8x32xf32>
    %265 = arith.subf %248, %264 : vector<8x32xf32>
    %cst_111 = arith.constant 9.99999996E-13 : f32
    %266 = vector.broadcast %cst_111 : f32 to vector<8x1xf32>
    %267 = arith.addf %263, %266 : vector<8x1xf32>
    %268 = math.rsqrt %267 : vector<8x1xf32>
    %269 = vector.broadcast %268 : vector<8x1xf32> to vector<8x32xf32>
    %270 = arith.mulf %265, %269 : vector<8x32xf32>
    %271 = vector.broadcast %250 : vector<1x32xf32> to vector<8x32xf32>
    %272 = arith.mulf %270, %271 : vector<8x32xf32>
    %273 = vector.broadcast %252 : vector<1x32xf32> to vector<8x32xf32>
    %274 = arith.addf %272, %273 : vector<8x32xf32>
    %275 = arith.truncf %274 : vector<8x32xf32> to vector<8x32xbf16>
    %c1_112 = arith.constant 1 : index
    %c0_113 = arith.constant 0 : index
    %c0_114 = arith.constant 0 : index
    %276 = vector.load %arg11[%c1_112, %c0_113, %c0_114] : memref<2x32x64xbf16, #tpu.memory_space<vmem>>, vector<1x32x64xbf16>
    %277 = vector.shape_cast %276 : vector<1x32x64xbf16> to vector<32x64xbf16>
    %cst_115 = arith.constant dense<0.000000e+00> : vector<8x64xf32>
    %278 = tpu.matmul %275, %277, %cst_115 {dimension_numbers = #tpu.dot_dimension_numbers<[1], [0], [0], [1], [0, 0, 1, 1], [], []>} : vector<8x32xbf16>, vector<32x64xbf16>, vector<8x64xf32> -> vector<8x64xf32>
    %c1_116 = arith.constant 1 : index
    %c0_117 = arith.constant 0 : index
    %c0_118 = arith.constant 0 : index
    %279 = vector.load %arg12[%c1_116, %c0_117, %c0_118] : memref<2x1x64xf32, #tpu.memory_space<vmem>>, vector<1x1x64xf32>
    %280 = vector.shape_cast %279 : vector<1x1x64xf32> to vector<1x64xf32>
    %281 = vector.broadcast %280 : vector<1x64xf32> to vector<8x64xf32>
    %282 = arith.addf %278, %281 : vector<8x64xf32>
    %283 = arith.mulf %282, %282 : vector<8x64xf32>
    %284 = arith.mulf %282, %283 : vector<8x64xf32>
    %cst_119 = arith.constant 4.471500e-02 : f32
    %285 = vector.broadcast %cst_119 : f32 to vector<8x64xf32>
    %286 = arith.mulf %285, %284 : vector<8x64xf32>
    %287 = arith.addf %282, %286 : vector<8x64xf32>
    %cst_120 = arith.constant 0.797884583 : f32
    %288 = vector.broadcast %cst_120 : f32 to vector<8x64xf32>
    %289 = arith.mulf %288, %287 : vector<8x64xf32>
    %290 = math.tanh %289 : vector<8x64xf32>
    %cst_121 = arith.constant 1.000000e+00 : f32
    %291 = vector.broadcast %cst_121 : f32 to vector<8x64xf32>
    %292 = arith.addf %291, %290 : vector<8x64xf32>
    %cst_122 = arith.constant 5.000000e-01 : f32
    %293 = vector.broadcast %cst_122 : f32 to vector<8x64xf32>
    %294 = arith.mulf %293, %292 : vector<8x64xf32>
    %295 = arith.mulf %282, %294 : vector<8x64xf32>
    %296 = arith.truncf %295 : vector<8x64xf32> to vector<8x64xbf16>
    %c1_123 = arith.constant 1 : index
    %c0_124 = arith.constant 0 : index
    %c0_125 = arith.constant 0 : index
    %297 = vector.load %arg13[%c1_123, %c0_124, %c0_125] : memref<2x64x32xbf16, #tpu.memory_space<vmem>>, vector<1x64x32xbf16>
    %298 = vector.shape_cast %297 : vector<1x64x32xbf16> to vector<64x32xbf16>
    %cst_126 = arith.constant dense<0.000000e+00> : vector<8x32xf32>
    %299 = tpu.matmul %296, %298, %cst_126 {dimension_numbers = #tpu.dot_dimension_numbers<[1], [0], [0], [1], [0, 0, 1, 1], [], []>} : vector<8x64xbf16>, vector<64x32xbf16>, vector<8x32xf32> -> vector<8x32xf32>
    %c1_127 = arith.constant 1 : index
    %c0_128 = arith.constant 0 : index
    %c0_129 = arith.constant 0 : index
    %300 = vector.load %arg14[%c1_127, %c0_128, %c0_129] : memref<2x1x32xf32, #tpu.memory_space<vmem>>, vector<1x1x32xf32>
    %301 = vector.shape_cast %300 : vector<1x1x32xf32> to vector<1x32xf32>
    %302 = vector.broadcast %301 : vector<1x32xf32> to vector<8x32xf32>
    %303 = arith.addf %299, %302 : vector<8x32xf32>
    %304 = arith.addf %303, %274 : vector<8x32xf32>
    %c1_130 = arith.constant 1 : index
    %c0_131 = arith.constant 0 : index
    %c0_132 = arith.constant 0 : index
    %305 = vector.load %arg15[%c1_130, %c0_131, %c0_132] : memref<2x1x32xf32, #tpu.memory_space<vmem>>, vector<1x1x32xf32>
    %306 = vector.shape_cast %305 : vector<1x1x32xf32> to vector<1x32xf32>
    %c1_133 = arith.constant 1 : index
    %c0_134 = arith.constant 0 : index
    %c0_135 = arith.constant 0 : index
    %307 = vector.load %arg16[%c1_133, %c0_134, %c0_135] : memref<2x1x32xf32, #tpu.memory_space<vmem>>, vector<1x1x32xf32>
    %308 = vector.shape_cast %307 : vector<1x1x32xf32> to vector<1x32xf32>
    %cst_136 = arith.constant dense<0.000000e+00> : vector<8xf32>
    %309 = vector.multi_reduction <add>, %304, %cst_136 [1] : vector<8x32xf32> to vector<8xf32>
    %310 = vector.shape_cast %309 : vector<8xf32> to vector<8x1xf32>
    %cst_137 = arith.constant 3.200000e+01 : f32
    %311 = vector.broadcast %cst_137 : f32 to vector<8x1xf32>
    %312 = arith.divf %310, %311 : vector<8x1xf32>
    %313 = vector.broadcast %312 : vector<8x1xf32> to vector<8x32xf32>
    %314 = arith.subf %304, %313 : vector<8x32xf32>
    %315 = arith.mulf %314, %314 : vector<8x32xf32>
    %cst_138 = arith.constant dense<0.000000e+00> : vector<8xf32>
    %316 = vector.multi_reduction <add>, %315, %cst_138 [1] : vector<8x32xf32> to vector<8xf32>
    %317 = vector.shape_cast %316 : vector<8xf32> to vector<8x1xf32>
    %cst_139 = arith.constant 3.200000e+01 : f32
    %318 = vector.broadcast %cst_139 : f32 to vector<8x1xf32>
    %319 = arith.divf %317, %318 : vector<8x1xf32>
    %320 = vector.broadcast %312 : vector<8x1xf32> to vector<8x32xf32>
    %321 = arith.subf %304, %320 : vector<8x32xf32>
    %cst_140 = arith.constant 9.99999996E-13 : f32
    %322 = vector.broadcast %cst_140 : f32 to vector<8x1xf32>
    %323 = arith.addf %319, %322 : vector<8x1xf32>
    %324 = math.rsqrt %323 : vector<8x1xf32>
    %325 = vector.broadcast %324 : vector<8x1xf32> to vector<8x32xf32>
    %326 = arith.mulf %321, %325 : vector<8x32xf32>
    %327 = vector.broadcast %306 : vector<1x32xf32> to vector<8x32xf32>
    %328 = arith.mulf %326, %327 : vector<8x32xf32>
    %329 = vector.broadcast %308 : vector<1x32xf32> to vector<8x32xf32>
    %330 = arith.addf %328, %329 : vector<8x32xf32>
    %331 = vector.extract_strided_slice %330 {offsets = [0, 0], sizes = [1, 32], strides = [1, 1]} : vector<8x32xf32> to vector<1x32xf32>
    %332 = arith.truncf %331 : vector<1x32xf32> to vector<1x32xbf16>
    %c0_141 = arith.constant 0 : index
    %c0_142 = arith.constant 0 : index
    %333 = vector.load %arg17[%c0_141, %c0_142] : memref<32x128xbf16, #tpu.memory_space<vmem>>, vector<32x128xbf16>
    %cst_143 = arith.constant dense<0.000000e+00> : vector<1x128xf32>
    %334 = tpu.matmul %332, %333, %cst_143 {dimension_numbers = #tpu.dot_dimension_numbers<[1], [0], [0], [1], [0, 0, 1, 1], [], []>} : vector<1x32xbf16>, vector<32x128xbf16>, vector<1x128xf32> -> vector<1x128xf32>
    %c0_144 = arith.constant 0 : index
    %c0_145 = arith.constant 0 : index
    %335 = vector.load %arg18[%c0_144, %c0_145] : memref<1x128xf32, #tpu.memory_space<vmem>>, vector<1x128xf32>
    %336 = arith.addf %334, %335 : vector<1x128xf32>
    %337 = vector.shape_cast %336 : vector<1x128xf32> to vector<1x1x128xf32>
    %c0_146 = arith.constant 0 : index
    %c0_147 = arith.constant 0 : index
    %c0_148 = arith.constant 0 : index
    %338 = vector.load %arg19[%c0_146, %c0_147, %c0_148] : memref<1x1x128xf32, #tpu.memory_space<vmem>>, vector<1x1x128xf32>
    tpu.vector_store %arg19[%c0_146, %c0_147, %c0_148], %337 {strides = array<i32>} : memref<1x1x128xf32, #tpu.memory_space<vmem>>, vector<1x1x128xf32>,
    return
  }
  func.func @transform_0(%arg0: i32) -> (i32, i32) {
    %c0_i32 = arith.constant 0 : i32
    %c0_i32_0 = arith.constant 0 : i32
    return %arg0, %c0_i32 : i32, i32
  }
  func.func @transform_1(%arg0: i32) -> (i32, i32, i32) {
    %c0_i32 = arith.constant 0 : i32
    %c0_i32_0 = arith.constant 0 : i32
    %c0_i32_1 = arith.constant 0 : i32
    return %arg0, %c0_i32, %c0_i32_0 : i32, i32, i32
  }
  func.func @transform_2(%arg0: i32) -> (i32, i32) {
    %c0_i32 = arith.constant 0 : i32
    %c0_i32_0 = arith.constant 0 : i32
    %c0_i32_1 = arith.constant 0 : i32
    return %c0_i32, %c0_i32_0 : i32, i32
  }
  func.func @transform_3(%arg0: i32) -> (i32, i32) {
    %c0_i32 = arith.constant 0 : i32
    %c0_i32_0 = arith.constant 0 : i32
    %c0_i32_1 = arith.constant 0 : i32
    return %c0_i32, %c0_i32_0 : i32, i32
  }
  func.func @transform_4(%arg0: i32) -> (i32, i32, i32) {
    %c0_i32 = arith.constant 0 : i32
    %c0_i32_0 = arith.constant 0 : i32
    %c0_i32_1 = arith.constant 0 : i32
    %c0_i32_2 = arith.constant 0 : i32
    return %c0_i32, %c0_i32_0, %c0_i32_1 : i32, i32, i32
  }
  func.func @transform_5(%arg0: i32) -> (i32, i32, i32) {
    %c0_i32 = arith.constant 0 : i32
    %c0_i32_0 = arith.constant 0 : i32
    %c0_i32_1 = arith.constant 0 : i32
    %c0_i32_2 = arith.constant 0 : i32
    return %c0_i32, %c0_i32_0, %c0_i32_1 : i32, i32, i32
  }
  func.func @transform_6(%arg0: i32) -> (i32, i32, i32) {
    %c0_i32 = arith.constant 0 : i32
    %c0_i32_0 = arith.constant 0 : i32
    %c0_i32_1 = arith.constant 0 : i32
    %c0_i32_2 = arith.constant 0 : i32
    return %c0_i32, %c0_i32_0, %c0_i32_1 : i32, i32, i32
  }
  func.func @transform_7(%arg0: i32) -> (i32, i32, i32) {
    %c0_i32 = arith.constant 0 : i32
    %c0_i32_0 = arith.constant 0 : i32
    %c0_i32_1 = arith.constant 0 : i32
    %c0_i32_2 = arith.constant 0 : i32
    return %c0_i32, %c0_i32_0, %c0_i32_1 : i32, i32, i32
  }
  func.func @transform_8(%arg0: i32) -> (i32, i32, i32) {
    %c0_i32 = arith.constant 0 : i32
    %c0_i32_0 = arith.constant 0 : i32
    %c0_i32_1 = arith.constant 0 : i32
    %c0_i32_2 = arith.constant 0 : i32
    return %c0_i32, %c0_i32_0, %c0_i32_1 : i32, i32, i32
  }
  func.func @transform_9(%arg0: i32) -> (i32, i32, i32) {
    %c0_i32 = arith.constant 0 : i32
    %c0_i32_0 = arith.constant 0 : i32
    %c0_i32_1 = arith.constant 0 : i32
    %c0_i32_2 = arith.constant 0 : i32
    return %c0_i32, %c0_i32_0, %c0_i32_1 : i32, i32, i32
  }
  func.func @transform_10(%arg0: i32) -> (i32, i32, i32) {
    %c0_i32 = arith.constant 0 : i32
    %c0_i32_0 = arith.constant 0 : i32
    %c0_i32_1 = arith.constant 0 : i32
    %c0_i32_2 = arith.constant 0 : i32
    return %c0_i32, %c0_i32_0, %c0_i32_1 : i32, i32, i32
  }
  func.func @transform_11(%arg0: i32) -> (i32, i32, i32) {
    %c0_i32 = arith.constant 0 : i32
    %c0_i32_0 = arith.constant 0 : i32
    %c0_i32_1 = arith.constant 0 : i32
    %c0_i32_2 = arith.constant 0 : i32
    return %c0_i32, %c0_i32_0, %c0_i32_1 : i32, i32, i32
  }
  func.func @transform_12(%arg0: i32) -> (i32, i32, i32) {
    %c0_i32 = arith.constant 0 : i32
    %c0_i32_0 = arith.constant 0 : i32
    %c0_i32_1 = arith.constant 0 : i32
    %c0_i32_2 = arith.constant 0 : i32
    return %c0_i32, %c0_i32_0, %c0_i32_1 : i32, i32, i32
  }
  func.func @transform_13(%arg0: i32) -> (i32, i32, i32) {
    %c0_i32 = arith.constant 0 : i32
    %c0_i32_0 = arith.constant 0 : i32
    %c0_i32_1 = arith.constant 0 : i32
    %c0_i32_2 = arith.constant 0 : i32
    return %c0_i32, %c0_i32_0, %c0_i32_1 : i32, i32, i32
  }
  func.func @transform_14(%arg0: i32) -> (i32, i32, i32) {
    %c0_i32 = arith.constant 0 : i32
    %c0_i32_0 = arith.constant 0 : i32
    %c0_i32_1 = arith.constant 0 : i32
    %c0_i32_2 = arith.constant 0 : i32
    return %c0_i32, %c0_i32_0, %c0_i32_1 : i32, i32, i32
  }
  func.func @transform_15(%arg0: i32) -> (i32, i32, i32) {
    %c0_i32 = arith.constant 0 : i32
    %c0_i32_0 = arith.constant 0 : i32
    %c0_i32_1 = arith.constant 0 : i32
    %c0_i32_2 = arith.constant 0 : i32
    return %c0_i32, %c0_i32_0, %c0_i32_1 : i32, i32, i32
  }
  func.func @transform_16(%arg0: i32) -> (i32, i32) {
    %c0_i32 = arith.constant 0 : i32
    %c0_i32_0 = arith.constant 0 : i32
    %c0_i32_1 = arith.constant 0 : i32
    return %c0_i32, %c0_i32_0 : i32, i32
  }
  func.func @transform_17(%arg0: i32) -> (i32, i32) {
    %c0_i32 = arith.constant 0 : i32
    %c0_i32_0 = arith.constant 0 : i32
    %c0_i32_1 = arith.constant 0 : i32
    return %c0_i32, %c0_i32_0 : i32, i32
  }
  func.func @transform_18(%arg0: i32) -> (i32, i32, i32) {
    %c0_i32 = arith.constant 0 : i32
    %c0_i32_0 = arith.constant 0 : i32
    %c0_i32_1 = arith.constant 0 : i32
    return %arg0, %c0_i32, %c0_i32_0 : i32, i32, i32
  }
}

</mosaic_0001>

<llo_original>
// kernel: gatortron_with_classifier.1
$region0: #{gatortron_with_classifier.1}
  #allocation0 [shape = 'u32[]', space=smem, size = 0x4, offset = 0x4, fixed_abs, tag = 'smem constant byte address 0x4 - core index']
  #allocation1 [shape = 'u32[144,128]{1,0:T(1,128)}', space=vmem, size = 0x12000, scoped, tag = 'internal scratch']
  %s0 = inlined_call_operand.vmem [shape: f32[16,32], index: 0, kind: input, shape index: {}]
  %s1 = inlined_call_operand.vmem [shape: f32[2,1,8], index: 1, kind: input, shape index: {}]
  %s2 = inlined_call_operand.vmem [shape: f32[1,32], index: 2, kind: input, shape index: {}]
  %s3 = inlined_call_operand.vmem [shape: f32[1,32], index: 3, kind: input, shape index: {}]
  %s4 = inlined_call_operand.vmem [shape: bf16[2,32,96], index: 4, kind: input, shape index: {}]
  %s5 = inlined_call_operand.vmem [shape: f32[2,1,96], index: 5, kind: input, shape index: {}]
  %s6 = inlined_call_operand.vmem [shape: bf16[2,32,32], index: 6, kind: input, shape index: {}]
  %s7 = inlined_call_operand.vmem [shape: f32[2,1,32], index: 7, kind: input, shape index: {}]
  %s8 = inlined_call_operand.vmem [shape: f32[2,1,32], index: 8, kind: input, shape index: {}]
  %s9 = inlined_call_operand.vmem [shape: f32[2,1,32], index: 9, kind: input, shape index: {}]
  %s10 = inlined_call_operand.vmem [shape: bf16[2,32,64], index: 10, kind: input, shape index: {}]
  %s11 = inlined_call_operand.vmem [shape: f32[2,1,64], index: 11, kind: input, shape index: {}]
  %s12 = inlined_call_operand.vmem [shape: bf16[2,64,32], index: 12, kind: input, shape index: {}]
  %s13 = inlined_call_operand.vmem [shape: f32[2,1,32], index: 13, kind: input, shape index: {}]
  %s14 = inlined_call_operand.vmem [shape: f32[2,1,32], index: 14, kind: input, shape index: {}]
  %s15 = inlined_call_operand.vmem [shape: f32[2,1,32], index: 15, kind: input, shape index: {}]
  %s16 = inlined_call_operand.vmem [shape: bf16[32,128], index: 16, kind: input, shape index: {}]
  %s17 = inlined_call_operand.vmem [shape: f32[1,128], index: 17, kind: input, shape index: {}]
  %s18 = inlined_call_operand.hbm [shape: f32[2,1,128], index: 18, kind: output, shape index: {}]
  %s19 = sld [smem:[#allocation0]]
  $region105: #{gatortron_with_classifier.1} parent=0
    _
  %s21 = ssub.s32 1, %s19
  %s22 = scalar_select 0, %s21, %s19
  $region1: #{gatortron_with_classifier.1} parent=0
    #allocation2 [shape = 'u8[1024]{0}', space=vmem, size = 0x400, scoped, tag = 'output window, operand 0']
    #allocation3 [shape = 's32[2]{0}', space=sflag, size = 0x8, scoped, tag = 'scoped memory for gatortron_with_classifier.1']
    %23 = vsyncpa [#allocation3], 0
    %s24 = scalar_lea.sflag [#allocation3], 1
    %25 = vsyncpa %s24, 0
    loop: start=0, step=1, limit=4
    $region2: #{gatortron_with_classifier.1} parent=1 // loop_pre_header
      _
    $region3: #{gatortron_with_classifier.1} parent=1 // loop_header
      %s27 = sphi 0, %s31
      %p28 = scmp.ge.s32.totalorder %s27, 4
      %s37 = sphi 0, %s39
      %s40 = sphi 0, %s37
      %s41 = sphi 0, %s40
      %s57 = sphi 0, %s41
      %s63 = sphi 0, %s65
      %s66 = sphi 0, %s63
      %s67 = sphi 0, %s66
      %s83 = sphi 0, %s67
      %s87 = sphi 0, %s87
      %s89 = sphi 0, %s87
      %s90 = sphi 0, %s89
      %s104 = sphi 0, %s90
      %s108 = sphi 0, %s108
      %s110 = sphi 0, %s108
      %s111 = sphi 0, %s110
      %s125 = sphi 0, %s111
      %s129 = sphi 0, %s129
      %s131 = sphi 0, %s129
      %s132 = sphi 0, %s131
      %s146 = sphi 0, %s132
      %s150 = sphi 0, %s150
      %s152 = sphi 0, %s150
      %s153 = sphi 0, %s152
      %s167 = sphi 0, %s153
      %s171 = sphi 0, %s171
      %s173 = sphi 0, %s171
      %s174 = sphi 0, %s173
      %s188 = sphi 0, %s174
      %s192 = sphi 0, %s192
      %s194 = sphi 0, %s192
      %s195 = sphi 0, %s194
      %s209 = sphi 0, %s195
      %s213 = sphi 0, %s213
      %s215 = sphi 0, %s213
      %s216 = sphi 0, %s215
      %s230 = sphi 0, %s216
      %s234 = sphi 0, %s234
      %s236 = sphi 0, %s234
      %s237 = sphi 0, %s236
      %s251 = sphi 0, %s237
      %s255 = sphi 0, %s255
      %s257 = sphi 0, %s255
      %s258 = sphi 0, %s257
      %s272 = sphi 0, %s258
      %s276 = sphi 0, %s276
      %s278 = sphi 0, %s276
      %s279 = sphi 0, %s278
      %s293 = sphi 0, %s279
      %s297 = sphi 0, %s297
      %s299 = sphi 0, %s297
      %s300 = sphi 0, %s299
      %s314 = sphi 0, %s300
      %s318 = sphi 0, %s318
      %s320 = sphi 0, %s318
      %s321 = sphi 0, %s320
      %s335 = sphi 0, %s321
      %s339 = sphi 0, %s339
      %s341 = sphi 0, %s339
      %s342 = sphi 0, %s341
      %s356 = sphi 0, %s342
      %s360 = sphi 0, %s360
      %s362 = sphi 0, %s360
      %s363 = sphi 0, %s362
      %s377 = sphi 0, %s363
      %s381 = sphi 0, %s381
      %s383 = sphi 0, %s381
      %s384 = sphi 0, %s383
      %s398 = sphi 0, %s384
      %s402 = sphi 0, %s402
      %s404 = sphi 0, %s402
      %s405 = sphi 0, %s404
      %s419 = sphi 0, %s405
      %s425 = sphi 0, %s427
      %s428 = sphi 0, %s425
      %s429 = sphi 0, %s428
      %s445 = sphi 0, %s429
    $region4: #{gatortron_with_classifier.1} parent=1 // loop_header_branch
      %30 = sbr.rel (%p28) target = $region8
    $region5: #{gatortron_with_classifier.1} parent=1 // loop_body
      %s32 = ssub.s32 %s27, 1
      %s33 = ssub.s32 %s27, 2
      %s34 = sadd.s32 %s27, 1
      %s35 = ssub.s32 %s27, %s34
      %p36 = scmp.eq.s32.totalorder %s35, 0
      %s38 = sadd.s32 %s37, 1
      %s39 = scalar_select %p36, %s37, %s38
      %p42 = pneg %p36
      %p43 = scmp.eq.s32.totalorder %s27, 1
      %p44 = por %p42, %p43
      %p45 = scmp.ne.s32.totalorder %s37, %s40
      %p46 = scmp.eq.s32.totalorder %s27, 0
      %p47 = por %p45, %p46
      %p48 = scmp.ne.s32.totalorder %s37, %s40
      %p49 = scmp.eq.s32.totalorder %s32, 1
      %p50 = por %p48, %p49
      %p51 = scmp.ne.s32.totalorder %s40, %s41
      %p52 = scmp.eq.s32.totalorder %s32, 0
      %p53 = por %p51, %p52
      %p54 = scmp.ne.s32.totalorder %s40, %s41
      %p55 = scmp.eq.s32.totalorder %s33, 1
      %p56 = por %p54, %p55
      %p58 = scmp.ne.s32.totalorder %s41, %s57
      %p59 = scmp.eq.s32.totalorder %s33, 0
      %p60 = por %p58, %p59
      %s61 = ssub.s32 %s27, %s34
      %p62 = scmp.eq.s32.totalorder %s61, 0
      %s64 = sadd.s32 %s63, 1
      %s65 = scalar_select %p62, %s63, %s64
      %p68 = pneg %p62
      %p69 = scmp.eq.s32.totalorder %s27, 1
      %p70 = por %p68, %p69
      %p71 = scmp.ne.s32.totalorder %s63, %s66
      %p72 = scmp.eq.s32.totalorder %s27, 0
      %p73 = por %p71, %p72
      %p74 = scmp.ne.s32.totalorder %s63, %s66
      %p75 = scmp.eq.s32.totalorder %s32, 1
      %p76 = por %p74, %p75
      %p77 = scmp.ne.s32.totalorder %s66, %s67
      %p78 = scmp.eq.s32.totalorder %s32, 0
      %p79 = por %p77, %p78
      %p80 = scmp.ne.s32.totalorder %s66, %s67
      %p81 = scmp.eq.s32.totalorder %s33, 1
      %p82 = por %p80, %p81
      %p84 = scmp.ne.s32.totalorder %s67, %s83
      %p85 = scmp.eq.s32.totalorder %s33, 0
      %p86 = por %p84, %p85
      %s88 = sadd.s32 %s87, 1
      %p91 = scmp.eq.s32.totalorder %s27, 1
      %p92 = scmp.ne.s32.totalorder %s87, %s89
      %p93 = scmp.eq.s32.totalorder %s27, 0
      %p94 = por %p92, %p93
      %p95 = scmp.ne.s32.totalorder %s87, %s89
      %p96 = scmp.eq.s32.totalorder %s32, 1
      %p97 = por %p95, %p96
      %p98 = scmp.ne.s32.totalorder %s89, %s90
      %p99 = scmp.eq.s32.totalorder %s32, 0
      %p100 = por %p98, %p99
      %p101 = scmp.ne.s32.totalorder %s89, %s90
      %p102 = scmp.eq.s32.totalorder %s33, 1
      %p103 = por %p101, %p102
      %p105 = scmp.ne.s32.totalorder %s90, %s104
      %p106 = scmp.eq.s32.totalorder %s33, 0
      %p107 = por %p105, %p106
      %s109 = sadd.s32 %s108, 1
      %p112 = scmp.eq.s32.totalorder %s27, 1
      %p113 = scmp.ne.s32.totalorder %s108, %s110
      %p114 = scmp.eq.s32.totalorder %s27, 0
      %p115 = por %p113, %p114
      %p116 = scmp.ne.s32.totalorder %s108, %s110
      %p117 = scmp.eq.s32.totalorder %s32, 1
      %p118 = por %p116, %p117
      %p119 = scmp.ne.s32.totalorder %s110, %s111
      %p120 = scmp.eq.s32.totalorder %s32, 0
      %p121 = por %p119, %p120
      %p122 = scmp.ne.s32.totalorder %s110, %s111
      %p123 = scmp.eq.s32.totalorder %s33, 1
      %p124 = por %p122, %p123
      %p126 = scmp.ne.s32.totalorder %s111, %s125
      %p127 = scmp.eq.s32.totalorder %s33, 0
      %p128 = por %p126, %p127
      %s130 = sadd.s32 %s129, 1
      %p133 = scmp.eq.s32.totalorder %s27, 1
      %p134 = scmp.ne.s32.totalorder %s129, %s131
      %p135 = scmp.eq.s32.totalorder %s27, 0
      %p136 = por %p134, %p135
      %p137 = scmp.ne.s32.totalorder %s129, %s131
      %p138 = scmp.eq.s32.totalorder %s32, 1
      %p139 = por %p137, %p138
      %p140 = scmp.ne.s32.totalorder %s131, %s132
      %p141 = scmp.eq.s32.totalorder %s32, 0
      %p142 = por %p140, %p141
      %p143 = scmp.ne.s32.totalorder %s131, %s132
      %p144 = scmp.eq.s32.totalorder %s33, 1
      %p145 = por %p143, %p144
      %p147 = scmp.ne.s32.totalorder %s132, %s146
      %p148 = scmp.eq.s32.totalorder %s33, 0
      %p149 = por %p147, %p148
      %s151 = sadd.s32 %s150, 1
      %p154 = scmp.eq.s32.totalorder %s27, 1
      %p155 = scmp.ne.s32.totalorder %s150, %s152
      %p156 = scmp.eq.s32.totalorder %s27, 0
      %p157 = por %p155, %p156
      %p158 = scmp.ne.s32.totalorder %s150, %s152
      %p159 = scmp.eq.s32.totalorder %s32, 1
      %p160 = por %p158, %p159
      %p161 = scmp.ne.s32.totalorder %s152, %s153
      %p162 = scmp.eq.s32.totalorder %s32, 0
      %p163 = por %p161, %p162
      %p164 = scmp.ne.s32.totalorder %s152, %s153
      %p165 = scmp.eq.s32.totalorder %s33, 1
      %p166 = por %p164, %p165
      %p168 = scmp.ne.s32.totalorder %s153, %s167
      %p169 = scmp.eq.s32.totalorder %s33, 0
      %p170 = por %p168, %p169
      %s172 = sadd.s32 %s171, 1
      %p175 = scmp.eq.s32.totalorder %s27, 1
      %p176 = scmp.ne.s32.totalorder %s171, %s173
      %p177 = scmp.eq.s32.totalorder %s27, 0
      %p178 = por %p176, %p177
      %p179 = scmp.ne.s32.totalorder %s171, %s173
      %p180 = scmp.eq.s32.totalorder %s32, 1
      %p181 = por %p179, %p180
      %p182 = scmp.ne.s32.totalorder %s173, %s174
      %p183 = scmp.eq.s32.totalorder %s32, 0
      %p184 = por %p182, %p183
      %p185 = scmp.ne.s32.totalorder %s173, %s174
      %p186 = scmp.eq.s32.totalorder %s33, 1
      %p187 = por %p185, %p186
      %p189 = scmp.ne.s32.totalorder %s174, %s188
      %p190 = scmp.eq.s32.totalorder %s33, 0
      %p191 = por %p189, %p190
      %s193 = sadd.s32 %s192, 1
      %p196 = scmp.eq.s32.totalorder %s27, 1
      %p197 = scmp.ne.s32.totalorder %s192, %s194
      %p198 = scmp.eq.s32.totalorder %s27, 0
      %p199 = por %p197, %p198
      %p200 = scmp.ne.s32.totalorder %s192, %s194
      %p201 = scmp.eq.s32.totalorder %s32, 1
      %p202 = por %p200, %p201
      %p203 = scmp.ne.s32.totalorder %s194, %s195
      %p204 = scmp.eq.s32.totalorder %s32, 0
      %p205 = por %p203, %p204
      %p206 = scmp.ne.s32.totalorder %s194, %s195
      %p207 = scmp.eq.s32.totalorder %s33, 1
      %p208 = por %p206, %p207
      %p210 = scmp.ne.s32.totalorder %s195, %s209
      %p211 = scmp.eq.s32.totalorder %s33, 0
      %p212 = por %p210, %p211
      %s214 = sadd.s32 %s213, 1
      %p217 = scmp.eq.s32.totalorder %s27, 1
      %p218 = scmp.ne.s32.totalorder %s213, %s215
      %p219 = scmp.eq.s32.totalorder %s27, 0
      %p220 = por %p218, %p219
      %p221 = scmp.ne.s32.totalorder %s213, %s215
      %p222 = scmp.eq.s32.totalorder %s32, 1
      %p223 = por %p221, %p222
      %p224 = scmp.ne.s32.totalorder %s215, %s216
      %p225 = scmp.eq.s32.totalorder %s32, 0
      %p226 = por %p224, %p225
      %p227 = scmp.ne.s32.totalorder %s215, %s216
      %p228 = scmp.eq.s32.totalorder %s33, 1
      %p229 = por %p227, %p228
      %p231 = scmp.ne.s32.totalorder %s216, %s230
      %p232 = scmp.eq.s32.totalorder %s33, 0
      %p233 = por %p231, %p232
      %s235 = sadd.s32 %s234, 1
      %p238 = scmp.eq.s32.totalorder %s27, 1
      %p239 = scmp.ne.s32.totalorder %s234, %s236
      %p240 = scmp.eq.s32.totalorder %s27, 0
      %p241 = por %p239, %p240
      %p242 = scmp.ne.s32.totalorder %s234, %s236
      %p243 = scmp.eq.s32.totalorder %s32, 1
      %p244 = por %p242, %p243
      %p245 = scmp.ne.s32.totalorder %s236, %s237
      %p246 = scmp.eq.s32.totalorder %s32, 0
      %p247 = por %p245, %p246
      %p248 = scmp.ne.s32.totalorder %s236, %s237
      %p249 = scmp.eq.s32.totalorder %s33, 1
      %p250 = por %p248, %p249
      %p252 = scmp.ne.s32.totalorder %s237, %s251
      %p253 = scmp.eq.s32.totalorder %s33, 0
      %p254 = por %p252, %p253
      %s256 = sadd.s32 %s255, 1
      %p259 = scmp.eq.s32.totalorder %s27, 1
      %p260 = scmp.ne.s32.totalorder %s255, %s257
      %p261 = scmp.eq.s32.totalorder %s27, 0
      %p262 = por %p260, %p261
      %p263 = scmp.ne.s32.totalorder %s255, %s257
      %p264 = scmp.eq.s32.totalorder %s32, 1
      %p265 = por %p263, %p264
      %p266 = scmp.ne.s32.totalorder %s257, %s258
      %p267 = scmp.eq.s32.totalorder %s32, 0
      %p268 = por %p266, %p267
      %p269 = scmp.ne.s32.totalorder %s257, %s258
      %p270 = scmp.eq.s32.totalorder %s33, 1
      %p271 = por %p269, %p270
      %p273 = scmp.ne.s32.totalorder %s258, %s272
      %p274 = scmp.eq.s32.totalorder %s33, 0
      %p275 = por %p273, %p274
      %s277 = sadd.s32 %s276, 1
      %p280 = scmp.eq.s32.totalorder %s27, 1
      %p281 = scmp.ne.s32.totalorder %s276, %s278
      %p282 = scmp.eq.s32.totalorder %s27, 0
      %p283 = por %p281, %p282
      %p284 = scmp.ne.s32.totalorder %s276, %s278
      %p285 = scmp.eq.s32.totalorder %s32, 1
      %p286 = por %p284, %p285
      %p287 = scmp.ne.s32.totalorder %s278, %s279
      %p288 = scmp.eq.s32.totalorder %s32, 0
      %p289 = por %p287, %p288
      %p290 = scmp.ne.s32.totalorder %s278, %s279
      %p291 = scmp.eq.s32.totalorder %s33, 1
      %p292 = por %p290, %p291
      %p294 = scmp.ne.s32.totalorder %s279, %s293
      %p295 = scmp.eq.s32.totalorder %s33, 0
      %p296 = por %p294, %p295
      %s298 = sadd.s32 %s297, 1
      %p301 = scmp.eq.s32.totalorder %s27, 1
      %p302 = scmp.ne.s32.totalorder %s297, %s299
      %p303 = scmp.eq.s32.totalorder %s27, 0
      %p304 = por %p302, %p303
      %p305 = scmp.ne.s32.totalorder %s297, %s299
      %p306 = scmp.eq.s32.totalorder %s32, 1
      %p307 = por %p305, %p306
      %p308 = scmp.ne.s32.totalorder %s299, %s300
      %p309 = scmp.eq.s32.totalorder %s32, 0
      %p310 = por %p308, %p309
      %p311 = scmp.ne.s32.totalorder %s299, %s300
      %p312 = scmp.eq.s32.totalorder %s33, 1
      %p313 = por %p311, %p312
      %p315 = scmp.ne.s32.totalorder %s300, %s314
      %p316 = scmp.eq.s32.totalorder %s33, 0
      %p317 = por %p315, %p316
      %s319 = sadd.s32 %s318, 1
      %p322 = scmp.eq.s32.totalorder %s27, 1
      %p323 = scmp.ne.s32.totalorder %s318, %s320
      %p324 = scmp.eq.s32.totalorder %s27, 0
      %p325 = por %p323, %p324
      %p326 = scmp.ne.s32.totalorder %s318, %s320
      %p327 = scmp.eq.s32.totalorder %s32, 1
      %p328 = por %p326, %p327
      %p329 = scmp.ne.s32.totalorder %s320, %s321
      %p330 = scmp.eq.s32.totalorder %s32, 0
      %p331 = por %p329, %p330
      %p332 = scmp.ne.s32.totalorder %s320, %s321
      %p333 = scmp.eq.s32.totalorder %s33, 1
      %p334 = por %p332, %p333
      %p336 = scmp.ne.s32.totalorder %s321, %s335
      %p337 = scmp.eq.s32.totalorder %s33, 0
      %p338 = por %p336, %p337
      %s340 = sadd.s32 %s339, 1
      %p343 = scmp.eq.s32.totalorder %s27, 1
      %p344 = scmp.ne.s32.totalorder %s339, %s341
      %p345 = scmp.eq.s32.totalorder %s27, 0
      %p346 = por %p344, %p345
      %p347 = scmp.ne.s32.totalorder %s339, %s341
      %p348 = scmp.eq.s32.totalorder %s32, 1
      %p349 = por %p347, %p348
      %p350 = scmp.ne.s32.totalorder %s341, %s342
      %p351 = scmp.eq.s32.totalorder %s32, 0
      %p352 = por %p350, %p351
      %p353 = scmp.ne.s32.totalorder %s341, %s342
      %p354 = scmp.eq.s32.totalorder %s33, 1
      %p355 = por %p353, %p354
      %p357 = scmp.ne.s32.totalorder %s342, %s356
      %p358 = scmp.eq.s32.totalorder %s33, 0
      %p359 = por %p357, %p358
      %s361 = sadd.s32 %s360, 1
      %p364 = scmp.eq.s32.totalorder %s27, 1
      %p365 = scmp.ne.s32.totalorder %s360, %s362
      %p366 = scmp.eq.s32.totalorder %s27, 0
      %p367 = por %p365, %p366
      %p368 = scmp.ne.s32.totalorder %s360, %s362
      %p369 = scmp.eq.s32.totalorder %s32, 1
      %p370 = por %p368, %p369
      %p371 = scmp.ne.s32.totalorder %s362, %s363
      %p372 = scmp.eq.s32.totalorder %s32, 0
      %p373 = por %p371, %p372
      %p374 = scmp.ne.s32.totalorder %s362, %s363
      %p375 = scmp.eq.s32.totalorder %s33, 1
      %p376 = por %p374, %p375
      %p378 = scmp.ne.s32.totalorder %s363, %s377
      %p379 = scmp.eq.s32.totalorder %s33, 0
      %p380 = por %p378, %p379
      %s382 = sadd.s32 %s381, 1
      %p385 = scmp.eq.s32.totalorder %s27, 1
      %p386 = scmp.ne.s32.totalorder %s381, %s383
      %p387 = scmp.eq.s32.totalorder %s27, 0
      %p388 = por %p386, %p387
      %p389 = scmp.ne.s32.totalorder %s381, %s383
      %p390 = scmp.eq.s32.totalorder %s32, 1
      %p391 = por %p389, %p390
      %p392 = scmp.ne.s32.totalorder %s383, %s384
      %p393 = scmp.eq.s32.totalorder %s32, 0
      %p394 = por %p392, %p393
      %p395 = scmp.ne.s32.totalorder %s383, %s384
      %p396 = scmp.eq.s32.totalorder %s33, 1
      %p397 = por %p395, %p396
      %p399 = scmp.ne.s32.totalorder %s384, %s398
      %p400 = scmp.eq.s32.totalorder %s33, 0
      %p401 = por %p399, %p400
      %s403 = sadd.s32 %s402, 1
      %p406 = scmp.eq.s32.totalorder %s27, 1
      %p407 = scmp.ne.s32.totalorder %s402, %s404
      %p408 = scmp.eq.s32.totalorder %s27, 0
      %p409 = por %p407, %p408
      %p410 = scmp.ne.s32.totalorder %s402, %s404
      %p411 = scmp.eq.s32.totalorder %s32, 1
      %p412 = por %p410, %p411
      %p413 = scmp.ne.s32.totalorder %s404, %s405
      %p414 = scmp.eq.s32.totalorder %s32, 0
      %p415 = por %p413, %p414
      %p416 = scmp.ne.s32.totalorder %s404, %s405
      %p417 = scmp.eq.s32.totalorder %s33, 1
      %p418 = por %p416, %p417
      %p420 = scmp.ne.s32.totalorder %s405, %s419
      %p421 = scmp.eq.s32.totalorder %s33, 0
      %p422 = por %p420, %p421
      %s423 = ssub.s32 %s27, %s34
      %p424 = scmp.eq.s32.totalorder %s423, 0
      %s426 = sadd.s32 %s425, 1
      %s427 = scalar_select %p424, %s425, %s426
      %p430 = pneg %p424
      %p431 = scmp.eq.s32.totalorder %s27, 1
      %p432 = por %p430, %p431
      %p433 = scmp.ne.s32.totalorder %s425, %s428
      %p434 = scmp.eq.s32.totalorder %s27, 0
      %p435 = por %p433, %p434
      %p436 = scmp.ne.s32.totalorder %s425, %s428
      %p437 = scmp.eq.s32.totalorder %s32, 1
      %p438 = por %p436, %p437
      %p439 = scmp.ne.s32.totalorder %s428, %s429
      %p440 = scmp.eq.s32.totalorder %s32, 0
      %p441 = por %p439, %p440
      %p442 = scmp.ne.s32.totalorder %s428, %s429
      %p443 = scmp.eq.s32.totalorder %s33, 1
      %p444 = por %p442, %p443
      %p446 = scmp.ne.s32.totalorder %s429, %s445
      %p447 = scmp.eq.s32.totalorder %s33, 0
      %p448 = por %p446, %p447
      %p449 = scmp.le.s32.totalorder 1, %s27
      %p450 = scmp.lt.s32.totalorder %s27, 3
      %p451 = pnand %p449, %p450
      %p452 = pneg %p451
      // Predicated region
      $region9: #{gatortron_with_classifier.1} parent=5 // pred_check
        _
      $region10: #{gatortron_with_classifier.1} parent=5 // pred_check_branch
        %454 = sbr.rel (%p451) target = $region12
      $region11: #{gatortron_with_classifier.1} parent=5 // pred_region
        %s455 = ssub.s32 %s27, 1
        // Predicated region
        $region13: #{gatortron_with_classifier.1} parent=11 // pred_check
          %p456 = pneg %p100
        $region14: #{gatortron_with_classifier.1} parent=11 // pred_check_branch
          %458 = sbr.rel (%p456) target = $region16
        $region15: #{gatortron_with_classifier.1} parent=11 // pred_region
          _
        $region16: #{gatortron_with_classifier.1} parent=11 // pred_fallthru
          _
        // Predicated region
        $region17: #{gatortron_with_classifier.1} parent=11 // pred_check
          %p459 = pneg %p121
        $region18: #{gatortron_with_classifier.1} parent=11 // pred_check_branch
          %461 = sbr.rel (%p459) target = $region20
        $region19: #{gatortron_with_classifier.1} parent=11 // pred_region
          _
        $region20: #{gatortron_with_classifier.1} parent=11 // pred_fallthru
          _
        // Predicated region
        $region21: #{gatortron_with_classifier.1} parent=11 // pred_check
          %p462 = pneg %p142
        $region22: #{gatortron_with_classifier.1} parent=11 // pred_check_branch
          %464 = sbr.rel (%p462) target = $region24
        $region23: #{gatortron_with_classifier.1} parent=11 // pred_region
          _
        $region24: #{gatortron_with_classifier.1} parent=11 // pred_fallthru
          _
        // Predicated region
        $region25: #{gatortron_with_classifier.1} parent=11 // pred_check
          %p465 = pneg %p163
        $region26: #{gatortron_with_classifier.1} parent=11 // pred_check_branch
          %467 = sbr.rel (%p465) target = $region28
        $region27: #{gatortron_with_classifier.1} parent=11 // pred_region
          _
        $region28: #{gatortron_with_classifier.1} parent=11 // pred_fallthru
          _
        // Predicated region
        $region29: #{gatortron_with_classifier.1} parent=11 // pred_check
          %p468 = pneg %p184
        $region30: #{gatortron_with_classifier.1} parent=11 // pred_check_branch
          %470 = sbr.rel (%p468) target = $region32
        $region31: #{gatortron_with_classifier.1} parent=11 // pred_region
          _
        $region32: #{gatortron_with_classifier.1} parent=11 // pred_fallthru
          _
        // Predicated region
        $region33: #{gatortron_with_classifier.1} parent=11 // pred_check
          %p471 = pneg %p205
        $region34: #{gatortron_with_classifier.1} parent=11 // pred_check_branch
          %473 = sbr.rel (%p471) target = $region36
        $region35: #{gatortron_with_classifier.1} parent=11 // pred_region
          _
        $region36: #{gatortron_with_classifier.1} parent=11 // pred_fallthru
          _
        // Predicated region
        $region37: #{gatortron_with_classifier.1} parent=11 // pred_check
          %p474 = pneg %p226
        $region38: #{gatortron_with_classifier.1} parent=11 // pred_check_branch
          %476 = sbr.rel (%p474) target = $region40
        $region39: #{gatortron_with_classifier.1} parent=11 // pred_region
          _
        $region40: #{gatortron_with_classifier.1} parent=11 // pred_fallthru
          _
        // Predicated region
        $region41: #{gatortron_with_classifier.1} parent=11 // pred_check
          %p477 = pneg %p247
        $region42: #{gatortron_with_classifier.1} parent=11 // pred_check_branch
          %479 = sbr.rel (%p477) target = $region44
        $region43: #{gatortron_with_classifier.1} parent=11 // pred_region
          _
        $region44: #{gatortron_with_classifier.1} parent=11 // pred_fallthru
          _
        // Predicated region
        $region45: #{gatortron_with_classifier.1} parent=11 // pred_check
          %p480 = pneg %p268
        $region46: #{gatortron_with_classifier.1} parent=11 // pred_check_branch
          %482 = sbr.rel (%p480) target = $region48
        $region47: #{gatortron_with_classifier.1} parent=11 // pred_region
          _
        $region48: #{gatortron_with_classifier.1} parent=11 // pred_fallthru
          _
        // Predicated region
        $region49: #{gatortron_with_classifier.1} parent=11 // pred_check
          %p483 = pneg %p289
        $region50: #{gatortron_with_classifier.1} parent=11 // pred_check_branch
          %485 = sbr.rel (%p483) target = $region52
        $region51: #{gatortron_with_classifier.1} parent=11 // pred_region
          _
        $region52: #{gatortron_with_classifier.1} parent=11 // pred_fallthru
          _
        // Predicated region
        $region53: #{gatortron_with_classifier.1} parent=11 // pred_check
          %p486 = pneg %p310
        $region54: #{gatortron_with_classifier.1} parent=11 // pred_check_branch
          %488 = sbr.rel (%p486) target = $region56
        $region55: #{gatortron_with_classifier.1} parent=11 // pred_region
          _
        $region56: #{gatortron_with_classifier.1} parent=11 // pred_fallthru
          _
        // Predicated region
        $region57: #{gatortron_with_classifier.1} parent=11 // pred_check
          %p489 = pneg %p331
        $region58: #{gatortron_with_classifier.1} parent=11 // pred_check_branch
          %491 = sbr.rel (%p489) target = $region60
        $region59: #{gatortron_with_classifier.1} parent=11 // pred_region
          _
        $region60: #{gatortron_with_classifier.1} parent=11 // pred_fallthru
          _
        // Predicated region
        $region61: #{gatortron_with_classifier.1} parent=11 // pred_check
          %p492 = pneg %p352
        $region62: #{gatortron_with_classifier.1} parent=11 // pred_check_branch
          %494 = sbr.rel (%p492) target = $region64
        $region63: #{gatortron_with_classifier.1} parent=11 // pred_region
          _
        $region64: #{gatortron_with_classifier.1} parent=11 // pred_fallthru
          _
        // Predicated region
        $region65: #{gatortron_with_classifier.1} parent=11 // pred_check
          %p495 = pneg %p373
        $region66: #{gatortron_with_classifier.1} parent=11 // pred_check_branch
          %497 = sbr.rel (%p495) target = $region68
        $region67: #{gatortron_with_classifier.1} parent=11 // pred_region
          _
        $region68: #{gatortron_with_classifier.1} parent=11 // pred_fallthru
          _
        // Predicated region
        $region69: #{gatortron_with_classifier.1} parent=11 // pred_check
          %p498 = pneg %p394
        $region70: #{gatortron_with_classifier.1} parent=11 // pred_check_branch
          %500 = sbr.rel (%p498) target = $region72
        $region71: #{gatortron_with_classifier.1} parent=11 // pred_region
          _
        $region72: #{gatortron_with_classifier.1} parent=11 // pred_fallthru
          _
        // Predicated region
        $region73: #{gatortron_with_classifier.1} parent=11 // pred_check
          %p501 = pneg %p415
        $region74: #{gatortron_with_classifier.1} parent=11 // pred_check_branch
          %503 = sbr.rel (%p501) target = $region76
        $region75: #{gatortron_with_classifier.1} parent=11 // pred_region
          _
        $region76: #{gatortron_with_classifier.1} parent=11 // pred_fallthru
          _
      $region12: #{gatortron_with_classifier.1} parent=5 // pred_fallthru
        _
      %p504 = scmp.lt.s32.totalorder %s27, 2
      // Predicated region
      $region77: #{gatortron_with_classifier.1} parent=5 // pred_check
        %p505 = pneg %p504
      $region78: #{gatortron_with_classifier.1} parent=5 // pred_check_branch
        %507 = sbr.rel (%p505) target = $region80
      $region79: #{gatortron_with_classifier.1} parent=5 // pred_region
        // Predicated region
        $region81: #{gatortron_with_classifier.1} parent=79 // pred_check
          %p508 = pneg %p47
        $region82: #{gatortron_with_classifier.1} parent=79 // pred_check_branch
          %510 = sbr.rel (%p508) target = $region84
        $region83: #{gatortron_with_classifier.1} parent=79 // pred_region
          %p511 = scmp.lt.s32.totalorder %s27, 1
          %s512 = scalar_select %p511, %s27, 1
          %s513 = smul.addr %s512, 8
          %s514 = scalar_lea.vmem %s0, %s513
        $region84: #{gatortron_with_classifier.1} parent=79 // pred_fallthru
          _
        // Predicated region
        $region85: #{gatortron_with_classifier.1} parent=79 // pred_check
          %p515 = pneg %p73
        $region86: #{gatortron_with_classifier.1} parent=79 // pred_check_branch
          %517 = sbr.rel (%p515) target = $region88
        $region87: #{gatortron_with_classifier.1} parent=79 // pred_region
          %p518 = scmp.lt.s32.totalorder %s27, 1
          %s519 = scalar_select %p518, %s27, 1
          %s520 = scalar_lea.vmem %s1, %s519
        $region88: #{gatortron_with_classifier.1} parent=79 // pred_fallthru
          _
      $region80: #{gatortron_with_classifier.1} parent=5 // pred_fallthru
        _
      %p521 = scmp.le.s32.totalorder 1, %s27
      %p522 = scmp.lt.s32.totalorder %s27, 3
      %p523 = pnand %p521, %p522
      %p524 = pneg %p523
      // Predicated region
      $region89: #{gatortron_with_classifier.1} parent=5 // pred_check
        _
      $region90: #{gatortron_with_classifier.1} parent=5 // pred_check_branch
        %526 = sbr.rel (%p523) target = $region92
      $region91: #{gatortron_with_classifier.1} parent=5 // pred_region
        %s527 = ssub.s32 %s27, 1
        %p528 = scmp.lt.s32.totalorder %s32, 1
        %s529 = scalar_select %p528, %s32, 1
        %s530 = smul.addr %s529, 8
        %s531 = scalar_lea.vmem %s0, %s530
        %p532 = pneg %p53
        %p533 = pneg %p50
        %p534 = scmp.lt.s32.totalorder %s32, 1
        %s535 = scalar_select %p534, %s32, 1
        %s536 = scalar_lea.vmem %s1, %s535
        %p537 = pneg %p79
        %p538 = pneg %p76
        %p539 = pneg %p100
        %p540 = pneg %p97
        %p541 = pneg %p121
        %p542 = pneg %p118
        %p543 = pneg %p142
        %p544 = pneg %p139
        %p545 = pneg %p163
        %p546 = pneg %p160
        %p547 = pneg %p184
        %p548 = pneg %p181
        %p549 = pneg %p205
        %p550 = pneg %p202
        %p551 = pneg %p226
        %p552 = pneg %p223
        %p553 = pneg %p247
        %p554 = pneg %p244
        %p555 = pneg %p268
        %p556 = pneg %p265
        %p557 = pneg %p289
        %p558 = pneg %p286
        %p559 = pneg %p310
        %p560 = pneg %p307
        %p561 = pneg %p331
        %p562 = pneg %p328
        %p563 = pneg %p352
        %p564 = pneg %p349
        %p565 = pneg %p373
        %p566 = pneg %p370
        %p567 = pneg %p394
        %p568 = pneg %p391
        %p569 = pneg %p415
        %p570 = pneg %p412
        %p571 = pneg %p441
        %p572 = pneg %p438
        %s573 = sand.u32 %s428, 1
        %s574 = scalar_lea.sflag [#allocation3], %s573
        %s575 = sand.u32 %s428, 1
        %s576 = scalar_lea.vmem [#allocation2], %s575
        %p577 = scmp.lt.s32.totalorder %s32, 1
        %s578 = scalar_select %p577, %s32, 1
        %s579 = smul.addr %s578, 8
        %s580 = scalar_lea.vmem %s0, %s579
        %p581 = scmp.lt.s32.totalorder %s32, 1
        %s582 = scalar_select %p581, %s32, 1
        %s583 = scalar_lea.vmem %s1, %s582
        %v585 = vld [vmem:[%s580] sm:$0xff]
        %v586 = vld [vmem:[%s2] sm:$0x1]
        %v587 = vld [vmem:[%s3] sm:$0x1]
        %vm588 = vcmask 261120
        %v589 = vsel %vm588, %v585, 0.0
        %590 = vadd.xlane.f32.xlu0 %v589
        %v591 = vpop.xlane.xlu0 %590
        %v592 = vrcp.pop 32.0
        %v593 = vmul.f32 %v591, %v592
        %v594 = vsub.f32 %v585, %v593
        %v595 = vmul.f32 %v594, %v594
        %v596 = vsel %vm588, %v595, 0.0
        %597 = vadd.xlane.f32.xlu0 %v596
        %v598 = vpop.xlane.xlu0 %597
        %v599 = vmul.f32 %v598, %v592
        %v600 = vadd.f32 %v599, 1e-12
        %v601 = vrsqrt.pop %v600
        %v602 = vmul.f32 %v594, %v601
        %v604 = vlaneseq
        %v605 = vshrl.u32 %v604, 7
        %v606 = vsub.s32 0, %v605
        %v607 = vrot.slane %v586, %v606
        %v609 = vmul.f32 %v602, %v607
        %v611 = vlaneseq
        %v612 = vshrl.u32 %v611, 7
        %v613 = vsub.s32 0, %v612
        %v614 = vrot.slane %v587, %v613
        %v616 = vadd.f32 %v609, %v614
        %v617 = vld [vmem:[%s583] sm:$0x1]
        %v618 = vpack.c.bf16 %v616, %v616
        %v619 = vld [vmem:[%s4] sm:$0xf]
        %v620 = vld [vmem:[%s4 + $0x4] sm:$0xf]
        %v621 = vld [vmem:[%s4 + $0x8] sm:$0xf]
        %v622 = vld [vmem:[%s4 + $0xc] sm:$0xf]
        %v623 = vld [vmem:[%s5] sm:$0x1]
        %v625 = vlaneseq
        %v626 = vshrl.u32 %v625, 7
        %v627 = vsub.s32 0, %v626
        %v628 = vrot.slane %v623, %v627
        %v634 = vunpack.c.l.b16 %v619
        %v635 = vunpack.c.l.b16 %v620
        %v636 = vunpack.c.l.b16 %v621
        %v637 = vunpack.c.l.b16 %v622
        %v638 = vpack.c.b16 %v635, %v634
        %v639 = vpack.c.b16 %v637, %v636
        %v643 = vsel %vm588, %v618, 0
        %645 = vmatprep.subr.bf16.mxu0 0
        %646 = vmatpush1.bf16.msra.mxu0 %v638
        %647 = vmatprep.subr.bf16.mxu0 0
        %648 = vmatpush1.bf16.msra.mxu0 %v639
        %649 = vmatprep.subr.bf16.mxu0 0
        %650 = vmatpush1.bf16.msra.mxu0 0
        %651 = vmatprep.subr.bf16.mxu0 0
        %652 = vmatpush1.bf16.msra.mxu0 0
        %653 = vmatprep.subr.bf16.mxu0 0
        %654 = vmatpush1.bf16.msra.mxu0 0
        %655 = vmatprep.subr.bf16.mxu0 0
        %656 = vmatpush1.bf16.msra.mxu0 0
        %657 = vmatprep.subr.bf16.mxu0 0
        %658 = vmatpush1.bf16.msra.mxu0 0
        %659 = vmatprep.subr.bf16.mxu0 0
        %660 = vmatpush1.bf16.msra.mxu0 0
        %661 = vmatprep.subr.bf16.mxu0 0
        %662 = vmatpush1.bf16.msra.mxu0 0
        %663 = vmatprep.subr.bf16.mxu0 0
        %664 = vmatpush1.bf16.msra.mxu0 0
        %665 = vmatprep.subr.bf16.mxu0 0
        %666 = vmatpush1.bf16.msra.mxu0 0
        %667 = vmatprep.subr.bf16.mxu0 0
        %668 = vmatpush1.bf16.msra.mxu0 0
        %669 = vmatprep.subr.bf16.mxu0 0
        %670 = vmatpush1.bf16.msra.mxu0 0
        %671 = vmatprep.subr.bf16.mxu0 0
        %672 = vmatpush1.bf16.msra.mxu0 0
        %673 = vmatprep.subr.bf16.mxu0 0
        %674 = vmatpush1.bf16.msra.mxu0 0
        %675 = vmatprep.subr.bf16.mxu0 0
        %676 = vmatpush1.bf16.msra.mxu0 0
        %677 = vmatprep.mubr.bf16.mxu0 0
        %678 = vmatmul.mubr.bf16.gmra.mrb[0].mxu0 %v643
        %v679 = vpop.f32.mrb[0].mxu0
        %v680 = vadd.f32 %v628, %v679
        %v681 = vpop.f32.mrb[0].mxu0
        %v682 = vpop.f32.mrb[0].mxu0
        %v683 = vpop.f32.mrb[0].mxu0
        %684 = vdwg.mxu0
        %v685 = vld [vmem:[%s6] sm:$0xf]
        %v686 = vld [vmem:[%s6 + $0x4] sm:$0xf]
        %v687 = vld [vmem:[%s6 + $0x8] sm:$0xf]
        %v688 = vld [vmem:[%s6 + $0xc] sm:$0xf]
        %v689 = vpack.c.bf16 %v680, %v680
        %691 = vrot.lane.b32.xlu0 %v689, 96
        %v692 = vpop.permute.xlu0 %691
        %vm693 = vcmask 130048
        %v695 = vsel %vm693, %v689, 0
        %v698 = vsel %vm693, %v692, 0
        %700 = vmatprep.subr.bf16.mxu0 0
        %701 = vmatpush1.bf16.xpose.msra.mxu0 %v698
        %702 = vmatprep.subr.bf16.mxu0 0
        %703 = vmatpush1.bf16.xpose.msra.mxu0 0
        %704 = vmatprep.subr.bf16.mxu0 0
        %705 = vmatpush1.bf16.xpose.msra.mxu0 0
        %706 = vmatprep.subr.bf16.mxu0 0
        %707 = vmatpush1.bf16.xpose.msra.mxu0 0
        %708 = vmatprep.subr.bf16.mxu0 0
        %709 = vmatpush1.bf16.xpose.msra.mxu0 0
        %710 = vmatprep.subr.bf16.mxu0 0
        %711 = vmatpush1.bf16.xpose.msra.mxu0 0
        %712 = vmatprep.subr.bf16.mxu0 0
        %713 = vmatpush1.bf16.xpose.msra.mxu0 0
        %714 = vmatprep.subr.bf16.mxu0 0
        %715 = vmatpush1.bf16.xpose.msra.mxu0 0
        %716 = vmatprep.subr.bf16.mxu0 0
        %717 = vmatpush1.bf16.xpose.msra.mxu0 0
        %718 = vmatprep.subr.bf16.mxu0 0
        %719 = vmatpush1.bf16.xpose.msra.mxu0 0
        %720 = vmatprep.subr.bf16.mxu0 0
        %721 = vmatpush1.bf16.xpose.msra.mxu0 0
        %722 = vmatprep.subr.bf16.mxu0 0
        %723 = vmatpush1.bf16.xpose.msra.mxu0 0
        %724 = vmatprep.subr.bf16.mxu0 0
        %725 = vmatpush1.bf16.xpose.msra.mxu0 0
        %726 = vmatprep.subr.bf16.mxu0 0
        %727 = vmatpush1.bf16.xpose.msra.mxu0 0
        %728 = vmatprep.subr.bf16.mxu0 0
        %729 = vmatpush1.bf16.xpose.msra.mxu0 0
        %730 = vmatprep.subr.bf16.mxu0 0
        %731 = vmatpush1.bf16.xpose.msra.mxu0 0
        %732 = vmatprep.mubr.bf16.mxu0 0
        %733 = vmatmul.mubr.bf16.gmra.mrb[0].mxu0 %v695
        %v734 = vpop.f32.mrb[0].mxu0
        %v735 = vadd.f32 0.0, %v734
        %v736 = vpop.f32.mrb[0].mxu0
        %v737 = vpop.f32.mrb[0].mxu0
        %v738 = vpop.f32.mrb[0].mxu0
        %739 = vdwg.mxu0
        %v740 = vmul.f32 %v735, 0.25
        %v742 = vlaneseq
        %v743 = vshrl.u32 %v742, 7
        %v744 = vsub.s32 0, %v743
        %v745 = vrot.slane %v617, %v744
        %v747 = vadd.f32 %v740, %v745
        %vm748 = vcmask 64512
        %v749 = vsel %vm748, %v747, -inf
        %750 = vmax.xlane.f32.xlu0 %v749
        %v751 = vpop.xlane.xlu0 %750
        %v752 = vsub.f32 %v747, %v751
        %v753 = vmul.f32 %v752, 1.442695
        %v754 = vpow.pop %v753
        %v755 = vsel %vm748, %v754, 0.0
        %756 = vadd.xlane.f32.xlu0 %v755
        %v757 = vpop.xlane.xlu0 %756
        %v758 = vrcp.pop %v757
        %v759 = vmul.f32 %v754, %v758
        %v760 = vpack.c.bf16 %v759, %v759
        %761 = vrot.lane.b32.xlu0 %v689, 64
        %v762 = vpop.permute.xlu0 %761
        %v764 = vsel %vm748, %v760, 0
        %vm766 = vcmask 1043456
        %v768 = vsel %vm766, %v762, 0
        %770 = vmatprep.subr.bf16.mxu0 0
        %771 = vmatpush1.bf16.msra.mxu0 %v768
        %772 = vmatprep.subr.bf16.mxu0 0
        %773 = vmatpush1.bf16.msra.mxu0 0
        %774 = vmatprep.subr.bf16.mxu0 0
        %775 = vmatpush1.bf16.msra.mxu0 0
        %776 = vmatprep.subr.bf16.mxu0 0
        %777 = vmatpush1.bf16.msra.mxu0 0
        %778 = vmatprep.subr.bf16.mxu0 0
        %779 = vmatpush1.bf16.msra.mxu0 0
        %780 = vmatprep.subr.bf16.mxu0 0
        %781 = vmatpush1.bf16.msra.mxu0 0
        %782 = vmatprep.subr.bf16.mxu0 0
        %783 = vmatpush1.bf16.msra.mxu0 0
        %784 = vmatprep.subr.bf16.mxu0 0
        %785 = vmatpush1.bf16.msra.mxu0 0
        %786 = vmatprep.subr.bf16.mxu0 0
        %787 = vmatpush1.bf16.msra.mxu0 0
        %788 = vmatprep.subr.bf16.mxu0 0
        %789 = vmatpush1.bf16.msra.mxu0 0
        %790 = vmatprep.subr.bf16.mxu0 0
        %791 = vmatpush1.bf16.msra.mxu0 0
        %792 = vmatprep.subr.bf16.mxu0 0
        %793 = vmatpush1.bf16.msra.mxu0 0
        %794 = vmatprep.subr.bf16.mxu0 0
        %795 = vmatpush1.bf16.msra.mxu0 0
        %796 = vmatprep.subr.bf16.mxu0 0
        %797 = vmatpush1.bf16.msra.mxu0 0
        %798 = vmatprep.subr.bf16.mxu0 0
        %799 = vmatpush1.bf16.msra.mxu0 0
        %800 = vmatprep.subr.bf16.mxu0 0
        %801 = vmatpush1.bf16.msra.mxu0 0
        %802 = vmatprep.mubr.bf16.mxu0 0
        %803 = vmatmul.mubr.bf16.gmra.mrb[0].mxu0 %v764
        %v804 = vpop.f32.mrb[0].mxu0
        %v805 = vadd.f32 0.0, %v804
        %v806 = vpop.f32.mrb[0].mxu0
        %v807 = vpop.f32.mrb[0].mxu0
        %v808 = vpop.f32.mrb[0].mxu0
        %809 = vdwg.mxu0
        %v810 = vpack.c.bf16 %v805, %v805
        %811 = vrot.lane.b32.xlu0 %v689, 112
        %v812 = vpop.permute.xlu0 %811
        %813 = vrot.lane.b32.xlu0 %v689, 80
        %v814 = vpop.permute.xlu0 %813
        %v816 = vsel %vm693, %v812, 0
        %v819 = vsel %vm693, %v814, 0
        %821 = vmatprep.subr.bf16.mxu0 0
        %822 = vmatpush1.bf16.xpose.msra.mxu0 %v819
        %823 = vmatprep.subr.bf16.mxu0 0
        %824 = vmatpush1.bf16.xpose.msra.mxu0 0
        %825 = vmatprep.subr.bf16.mxu0 0
        %826 = vmatpush1.bf16.xpose.msra.mxu0 0
        %827 = vmatprep.subr.bf16.mxu0 0
        %828 = vmatpush1.bf16.xpose.msra.mxu0 0
        %829 = vmatprep.subr.bf16.mxu0 0
        %830 = vmatpush1.bf16.xpose.msra.mxu0 0
        %831 = vmatprep.subr.bf16.mxu0 0
        %832 = vmatpush1.bf16.xpose.msra.mxu0 0
        %833 = vmatprep.subr.bf16.mxu0 0
        %834 = vmatpush1.bf16.xpose.msra.mxu0 0
        %835 = vmatprep.subr.bf16.mxu0 0
        %836 = vmatpush1.bf16.xpose.msra.mxu0 0
        %837 = vmatprep.subr.bf16.mxu0 0
        %838 = vmatpush1.bf16.xpose.msra.mxu0 0
        %839 = vmatprep.subr.bf16.mxu0 0
        %840 = vmatpush1.bf16.xpose.msra.mxu0 0
        %841 = vmatprep.subr.bf16.mxu0 0
        %842 = vmatpush1.bf16.xpose.msra.mxu0 0
        %843 = vmatprep.subr.bf16.mxu0 0
        %844 = vmatpush1.bf16.xpose.msra.mxu0 0
        %845 = vmatprep.subr.bf16.mxu0 0
        %846 = vmatpush1.bf16.xpose.msra.mxu0 0
        %847 = vmatprep.subr.bf16.mxu0 0
        %848 = vmatpush1.bf16.xpose.msra.mxu0 0
        %849 = vmatprep.subr.bf16.mxu0 0
        %850 = vmatpush1.bf16.xpose.msra.mxu0 0
        %851 = vmatprep.subr.bf16.mxu0 0
        %852 = vmatpush1.bf16.xpose.msra.mxu0 0
        %853 = vmatprep.mubr.bf16.mxu0 0
        %854 = vmatmul.mubr.bf16.gmra.mrb[0].mxu0 %v816
        %v855 = vpop.f32.mrb[0].mxu0
        %v856 = vadd.f32 0.0, %v855
        %v857 = vpop.f32.mrb[0].mxu0
        %v858 = vpop.f32.mrb[0].mxu0
        %v859 = vpop.f32.mrb[0].mxu0
        %860 = vdwg.mxu0
        %v861 = vmul.f32 %v856, 0.25
        %v862 = vadd.f32 %v861, %v745
        %v863 = vsel %vm748, %v862, -inf
        %864 = vmax.xlane.f32.xlu0 %v863
        %v865 = vpop.xlane.xlu0 %864
        %v866 = vsub.f32 %v862, %v865
        %v867 = vmul.f32 %v866, 1.442695
        %v868 = vpow.pop %v867
        %v869 = vsel %vm748, %v868, 0.0
        %870 = vadd.xlane.f32.xlu0 %v869
        %v871 = vpop.xlane.xlu0 %870
        %v872 = vrcp.pop %v871
        %v873 = vmul.f32 %v868, %v872
        %v874 = vpack.c.bf16 %v873, %v873
        %875 = vrot.lane.b32.xlu0 %v689, 48
        %v876 = vpop.permute.xlu0 %875
        %v878 = vsel %vm748, %v874, 0
        %v881 = vsel %vm766, %v876, 0
        %883 = vmatprep.subr.bf16.mxu0 0
        %884 = vmatpush1.bf16.msra.mxu0 %v881
        %885 = vmatprep.subr.bf16.mxu0 0
        %886 = vmatpush1.bf16.msra.mxu0 0
        %887 = vmatprep.subr.bf16.mxu0 0
        %888 = vmatpush1.bf16.msra.mxu0 0
        %889 = vmatprep.subr.bf16.mxu0 0
        %890 = vmatpush1.bf16.msra.mxu0 0
        %891 = vmatprep.subr.bf16.mxu0 0
        %892 = vmatpush1.bf16.msra.mxu0 0
        %893 = vmatprep.subr.bf16.mxu0 0
        %894 = vmatpush1.bf16.msra.mxu0 0
        %895 = vmatprep.subr.bf16.mxu0 0
        %896 = vmatpush1.bf16.msra.mxu0 0
        %897 = vmatprep.subr.bf16.mxu0 0
        %898 = vmatpush1.bf16.msra.mxu0 0
        %899 = vmatprep.subr.bf16.mxu0 0
        %900 = vmatpush1.bf16.msra.mxu0 0
        %901 = vmatprep.subr.bf16.mxu0 0
        %902 = vmatpush1.bf16.msra.mxu0 0
        %903 = vmatprep.subr.bf16.mxu0 0
        %904 = vmatpush1.bf16.msra.mxu0 0
        %905 = vmatprep.subr.bf16.mxu0 0
        %906 = vmatpush1.bf16.msra.mxu0 0
        %907 = vmatprep.subr.bf16.mxu0 0
        %908 = vmatpush1.bf16.msra.mxu0 0
        %909 = vmatprep.subr.bf16.mxu0 0
        %910 = vmatpush1.bf16.msra.mxu0 0
        %911 = vmatprep.subr.bf16.mxu0 0
        %912 = vmatpush1.bf16.msra.mxu0 0
        %913 = vmatprep.subr.bf16.mxu0 0
        %914 = vmatpush1.bf16.msra.mxu0 0
        %915 = vmatprep.mubr.bf16.mxu0 0
        %916 = vmatmul.mubr.bf16.gmra.mrb[0].mxu0 %v878
        %v917 = vpop.f32.mrb[0].mxu0
        %v918 = vadd.f32 0.0, %v917
        %v919 = vpop.f32.mrb[0].mxu0
        %v920 = vpop.f32.mrb[0].mxu0
        %v921 = vpop.f32.mrb[0].mxu0
        %922 = vdwg.mxu0
        %v923 = vpack.c.bf16 %v918, %v918
        %v926 = vunpack.c.l.b16 %v687
        %v927 = vunpack.c.l.b16 %v688
        %v928 = vpack.c.b16 %v927, %v926
        %v931 = vsel %vm693, %v923, 0
        %933 = vmatprep.subr.bf16.mxu0 0
        %934 = vmatpush1.bf16.msra.mxu0 %v928
        %935 = vmatprep.subr.bf16.mxu0 0
        %936 = vmatpush1.bf16.msra.mxu0 0
        %937 = vmatprep.subr.bf16.mxu0 0
        %938 = vmatpush1.bf16.msra.mxu0 0
        %939 = vmatprep.subr.bf16.mxu0 0
        %940 = vmatpush1.bf16.msra.mxu0 0
        %941 = vmatprep.subr.bf16.mxu0 0
        %942 = vmatpush1.bf16.msra.mxu0 0
        %943 = vmatprep.subr.bf16.mxu0 0
        %944 = vmatpush1.bf16.msra.mxu0 0
        %945 = vmatprep.subr.bf16.mxu0 0
        %946 = vmatpush1.bf16.msra.mxu0 0
        %947 = vmatprep.subr.bf16.mxu0 0
        %948 = vmatpush1.bf16.msra.mxu0 0
        %949 = vmatprep.subr.bf16.mxu0 0
        %950 = vmatpush1.bf16.msra.mxu0 0
        %951 = vmatprep.subr.bf16.mxu0 0
        %952 = vmatpush1.bf16.msra.mxu0 0
        %953 = vmatprep.subr.bf16.mxu0 0
        %954 = vmatpush1.bf16.msra.mxu0 0
        %955 = vmatprep.subr.bf16.mxu0 0
        %956 = vmatpush1.bf16.msra.mxu0 0
        %957 = vmatprep.subr.bf16.mxu0 0
        %958 = vmatpush1.bf16.msra.mxu0 0
        %959 = vmatprep.subr.bf16.mxu0 0
        %960 = vmatpush1.bf16.msra.mxu0 0
        %961 = vmatprep.subr.bf16.mxu0 0
        %962 = vmatpush1.bf16.msra.mxu0 0
        %963 = vmatprep.subr.bf16.mxu0 0
        %964 = vmatpush1.bf16.msra.mxu0 0
        %965 = vmatprep.mubr.bf16.mxu0 0
        %966 = vmatmul.mubr.bf16.gmra.mrb[0].mxu0 %v931
        %v967 = vpop.f32.mrb[0].mxu0
        %v968 = vadd.f32 0.0, %v967
        %v969 = vpop.f32.mrb[0].mxu0
        %v970 = vpop.f32.mrb[0].mxu0
        %v971 = vpop.f32.mrb[0].mxu0
        %972 = vdwg.mxu0
        %v975 = vunpack.c.l.b16 %v685
        %v976 = vunpack.c.l.b16 %v686
        %v977 = vpack.c.b16 %v976, %v975
        %v980 = vsel %vm693, %v810, 0
        %982 = vmatprep.subr.bf16.mxu0 0
        %983 = vmatpush1.bf16.msra.mxu0 %v977
        %984 = vmatprep.subr.bf16.mxu0 0
        %985 = vmatpush1.bf16.msra.mxu0 0
        %986 = vmatprep.subr.bf16.mxu0 0
        %987 = vmatpush1.bf16.msra.mxu0 0
        %988 = vmatprep.subr.bf16.mxu0 0
        %989 = vmatpush1.bf16.msra.mxu0 0
        %990 = vmatprep.subr.bf16.mxu0 0
        %991 = vmatpush1.bf16.msra.mxu0 0
        %992 = vmatprep.subr.bf16.mxu0 0
        %993 = vmatpush1.bf16.msra.mxu0 0
        %994 = vmatprep.subr.bf16.mxu0 0
        %995 = vmatpush1.bf16.msra.mxu0 0
        %996 = vmatprep.subr.bf16.mxu0 0
        %997 = vmatpush1.bf16.msra.mxu0 0
        %998 = vmatprep.subr.bf16.mxu0 0
        %999 = vmatpush1.bf16.msra.mxu0 0
        %1000 = vmatprep.subr.bf16.mxu0 0
        %1001 = vmatpush1.bf16.msra.mxu0 0
        %1002 = vmatprep.subr.bf16.mxu0 0
        %1003 = vmatpush1.bf16.msra.mxu0 0
        %1004 = vmatprep.subr.bf16.mxu0 0
        %1005 = vmatpush1.bf16.msra.mxu0 0
        %1006 = vmatprep.subr.bf16.mxu0 0
        %1007 = vmatpush1.bf16.msra.mxu0 0
        %1008 = vmatprep.subr.bf16.mxu0 0
        %1009 = vmatpush1.bf16.msra.mxu0 0
        %1010 = vmatprep.subr.bf16.mxu0 0
        %1011 = vmatpush1.bf16.msra.mxu0 0
        %1012 = vmatprep.subr.bf16.mxu0 0
        %1013 = vmatpush1.bf16.msra.mxu0 0
        %1014 = vmatprep.mubr.bf16.mxu0 0
        %1015 = vmatmul.mubr.bf16.gmra.mrb[0].mxu0 %v980
        %v1016 = vpop.f32.mrb[0].mxu0
        %v1017 = vadd.f32 %v968, %v1016
        %v1018 = vpop.f32.mrb[0].mxu0
        %v1019 = vpop.f32.mrb[0].mxu0
        %v1020 = vpop.f32.mrb[0].mxu0
        %1021 = vdwg.mxu0
        %v1022 = vld [vmem:[%s7] sm:$0x1]
        %v1024 = vlaneseq
        %v1025 = vshrl.u32 %v1024, 7
        %v1026 = vsub.s32 0, %v1025
        %v1027 = vrot.slane %v1022, %v1026
        %v1029 = vadd.f32 %v1017, %v1027
        %v1030 = vadd.f32 %v1029, %v616
        %v1031 = vld [vmem:[%s8] sm:$0x1]
        %v1032 = vld [vmem:[%s9] sm:$0x1]
        %v1033 = vsel %vm588, %v1030, 0.0
        %1034 = vadd.xlane.f32.xlu0 %v1033
        %v1035 = vpop.xlane.xlu0 %1034
        %v1036 = vmul.f32 %v1035, %v592
        %v1037 = vsub.f32 %v1030, %v1036
        %v1038 = vmul.f32 %v1037, %v1037
        %v1039 = vsel %vm588, %v1038, 0.0
        %1040 = vadd.xlane.f32.xlu0 %v1039
        %v1041 = vpop.xlane.xlu0 %1040
        %v1042 = vmul.f32 %v1041, %v592
        %v1043 = vadd.f32 %v1042, 1e-12
        %v1044 = vrsqrt.pop %v1043
        %v1045 = vmul.f32 %v1037, %v1044
        %v1047 = vlaneseq
        %v1048 = vshrl.u32 %v1047, 7
        %v1049 = vsub.s32 0, %v1048
        %v1050 = vrot.slane %v1031, %v1049
        %v1052 = vmul.f32 %v1045, %v1050
        %v1054 = vlaneseq
        %v1055 = vshrl.u32 %v1054, 7
        %v1056 = vsub.s32 0, %v1055
        %v1057 = vrot.slane %v1032, %v1056
        %v1059 = vadd.f32 %v1052, %v1057
        %v1060 = vpack.c.bf16 %v1059, %v1059
        %v1061 = vld [vmem:[%s10] sm:$0xf]
        %v1062 = vld [vmem:[%s10 + $0x4] sm:$0xf]
        %v1063 = vld [vmem:[%s10 + $0x8] sm:$0xf]
        %v1064 = vld [vmem:[%s10 + $0xc] sm:$0xf]
        %v1065 = vld [vmem:[%s11] sm:$0x1]
        %v1067 = vlaneseq
        %v1068 = vshrl.u32 %v1067, 7
        %v1069 = vsub.s32 0, %v1068
        %v1070 = vrot.slane %v1065, %v1069
        %v1076 = vunpack.c.l.b16 %v1061
        %v1077 = vunpack.c.l.b16 %v1062
        %v1078 = vunpack.c.l.b16 %v1063
        %v1079 = vunpack.c.l.b16 %v1064
        %v1080 = vpack.c.b16 %v1077, %v1076
        %v1081 = vpack.c.b16 %v1079, %v1078
        %v1085 = vsel %vm588, %v1060, 0
        %1087 = vmatprep.subr.bf16.mxu0 0
        %1088 = vmatpush1.bf16.msra.mxu0 %v1080
        %1089 = vmatprep.subr.bf16.mxu0 0
        %1090 = vmatpush1.bf16.msra.mxu0 %v1081
        %1091 = vmatprep.subr.bf16.mxu0 0
        %1092 = vmatpush1.bf16.msra.mxu0 0
        %1093 = vmatprep.subr.bf16.mxu0 0
        %1094 = vmatpush1.bf16.msra.mxu0 0
        %1095 = vmatprep.subr.bf16.mxu0 0
        %1096 = vmatpush1.bf16.msra.mxu0 0
        %1097 = vmatprep.subr.bf16.mxu0 0
        %1098 = vmatpush1.bf16.msra.mxu0 0
        %1099 = vmatprep.subr.bf16.mxu0 0
        %1100 = vmatpush1.bf16.msra.mxu0 0
        %1101 = vmatprep.subr.bf16.mxu0 0
        %1102 = vmatpush1.bf16.msra.mxu0 0
        %1103 = vmatprep.subr.bf16.mxu0 0
        %1104 = vmatpush1.bf16.msra.mxu0 0
        %1105 = vmatprep.subr.bf16.mxu0 0
        %1106 = vmatpush1.bf16.msra.mxu0 0
        %1107 = vmatprep.subr.bf16.mxu0 0
        %1108 = vmatpush1.bf16.msra.mxu0 0
        %1109 = vmatprep.subr.bf16.mxu0 0
        %1110 = vmatpush1.bf16.msra.mxu0 0
        %1111 = vmatprep.subr.bf16.mxu0 0
        %1112 = vmatpush1.bf16.msra.mxu0 0
        %1113 = vmatprep.subr.bf16.mxu0 0
        %1114 = vmatpush1.bf16.msra.mxu0 0
        %1115 = vmatprep.subr.bf16.mxu0 0
        %1116 = vmatpush1.bf16.msra.mxu0 0
        %1117 = vmatprep.subr.bf16.mxu0 0
        %1118 = vmatpush1.bf16.msra.mxu0 0
        %1119 = vmatprep.mubr.bf16.mxu0 0
        %1120 = vmatmul.mubr.bf16.gmra.mrb[0].mxu0 %v1085
        %v1121 = vpop.f32.mrb[0].mxu0
        %v1122 = vadd.f32 %v1070, %v1121
        %v1123 = vpop.f32.mrb[0].mxu0
        %v1124 = vpop.f32.mrb[0].mxu0
        %v1125 = vpop.f32.mrb[0].mxu0
        %1126 = vdwg.mxu0
        %v1127 = vmul.f32 %v1122, %v1122
        %v1128 = vmul.f32 %v1122, %v1127
        %v1129 = vmul.f32 %v1128, 0.044715
        %v1130 = vadd.f32 %v1122, %v1129
        %v1131 = vmul.f32 %v1130, 0.7978846
        %v1132 = vtanh.pop %v1131
        %v1133 = vadd.f32 %v1132, 1.0
        %v1134 = vmul.f32 %v1133, 0.5
        %v1135 = vmul.f32 %v1122, %v1134
        %v1136 = vpack.c.bf16 %v1135, %v1135
        %v1137 = vld [vmem:[%s12] sm:$0xf]
        %v1138 = vld [vmem:[%s12 + $0x4] sm:$0xf]
        %v1139 = vld [vmem:[%s12 + $0x8] sm:$0xf]
        %v1140 = vld [vmem:[%s12 + $0xc] sm:$0xf]
        %v1141 = vld [vmem:[%s12 + $0x10] sm:$0xf]
        %v1142 = vld [vmem:[%s12 + $0x14] sm:$0xf]
        %v1143 = vld [vmem:[%s12 + $0x18] sm:$0xf]
        %v1144 = vld [vmem:[%s12 + $0x1c] sm:$0xf]
        %v1145 = vld [vmem:[%s13] sm:$0x1]
        %v1147 = vlaneseq
        %v1148 = vshrl.u32 %v1147, 7
        %v1149 = vsub.s32 0, %v1148
        %v1150 = vrot.slane %v1145, %v1149
        %v1160 = vunpack.c.l.b16 %v1137
        %v1161 = vunpack.c.l.b16 %v1138
        %v1162 = vunpack.c.l.b16 %v1139
        %v1163 = vunpack.c.l.b16 %v1140
        %v1164 = vunpack.c.l.b16 %v1141
        %v1165 = vunpack.c.l.b16 %v1142
        %v1166 = vunpack.c.l.b16 %v1143
        %v1167 = vunpack.c.l.b16 %v1144
        %v1168 = vpack.c.b16 %v1161, %v1160
        %v1169 = vpack.c.b16 %v1163, %v1162
        %v1170 = vpack.c.b16 %v1165, %v1164
        %v1171 = vpack.c.b16 %v1167, %v1166
        %vm1176 = vcmask 523264
        %v1178 = vsel %vm1176, %v1136, 0
        %1180 = vmatprep.subr.bf16.mxu0 0
        %1181 = vmatpush1.bf16.msra.mxu0 %v1168
        %1182 = vmatprep.subr.bf16.mxu0 0
        %1183 = vmatpush1.bf16.msra.mxu0 %v1169
        %1184 = vmatprep.subr.bf16.mxu0 0
        %1185 = vmatpush1.bf16.msra.mxu0 %v1170
        %1186 = vmatprep.subr.bf16.mxu0 0
        %1187 = vmatpush1.bf16.msra.mxu0 %v1171
        %1188 = vmatprep.subr.bf16.mxu0 0
        %1189 = vmatpush1.bf16.msra.mxu0 0
        %1190 = vmatprep.subr.bf16.mxu0 0
        %1191 = vmatpush1.bf16.msra.mxu0 0
        %1192 = vmatprep.subr.bf16.mxu0 0
        %1193 = vmatpush1.bf16.msra.mxu0 0
        %1194 = vmatprep.subr.bf16.mxu0 0
        %1195 = vmatpush1.bf16.msra.mxu0 0
        %1196 = vmatprep.subr.bf16.mxu0 0
        %1197 = vmatpush1.bf16.msra.mxu0 0
        %1198 = vmatprep.subr.bf16.mxu0 0
        %1199 = vmatpush1.bf16.msra.mxu0 0
        %1200 = vmatprep.subr.bf16.mxu0 0
        %1201 = vmatpush1.bf16.msra.mxu0 0
        %1202 = vmatprep.subr.bf16.mxu0 0
        %1203 = vmatpush1.bf16.msra.mxu0 0
        %1204 = vmatprep.subr.bf16.mxu0 0
        %1205 = vmatpush1.bf16.msra.mxu0 0
        %1206 = vmatprep.subr.bf16.mxu0 0
        %1207 = vmatpush1.bf16.msra.mxu0 0
        %1208 = vmatprep.subr.bf16.mxu0 0
        %1209 = vmatpush1.bf16.msra.mxu0 0
        %1210 = vmatprep.subr.bf16.mxu0 0
        %1211 = vmatpush1.bf16.msra.mxu0 0
        %1212 = vmatprep.mubr.bf16.mxu0 0
        %1213 = vmatmul.mubr.bf16.gmra.mrb[0].mxu0 %v1178
        %v1214 = vpop.f32.mrb[0].mxu0
        %v1215 = vadd.f32 %v1150, %v1214
        %v1216 = vpop.f32.mrb[0].mxu0
        %v1217 = vpop.f32.mrb[0].mxu0
        %v1218 = vpop.f32.mrb[0].mxu0
        %1219 = vdwg.mxu0
        %v1220 = vadd.f32 %v1215, %v1059
        %v1221 = vld [vmem:[%s14] sm:$0x1]
        %v1222 = vld [vmem:[%s15] sm:$0x1]
        %v1223 = vsel %vm588, %v1220, 0.0
        %1224 = vadd.xlane.f32.xlu0 %v1223
        %v1225 = vpop.xlane.xlu0 %1224
        %v1226 = vmul.f32 %v1225, %v592
        %v1227 = vsub.f32 %v1220, %v1226
        %v1228 = vmul.f32 %v1227, %v1227
        %v1229 = vsel %vm588, %v1228, 0.0
        %1230 = vadd.xlane.f32.xlu0 %v1229
        %v1231 = vpop.xlane.xlu0 %1230
        %v1232 = vmul.f32 %v1231, %v592
        %v1233 = vadd.f32 %v1232, 1e-12
        %v1234 = vrsqrt.pop %v1233
        %v1235 = vmul.f32 %v1227, %v1234
        %v1237 = vlaneseq
        %v1238 = vshrl.u32 %v1237, 7
        %v1239 = vsub.s32 0, %v1238
        %v1240 = vrot.slane %v1221, %v1239
        %v1242 = vmul.f32 %v1235, %v1240
        %v1244 = vlaneseq
        %v1245 = vshrl.u32 %v1244, 7
        %v1246 = vsub.s32 0, %v1245
        %v1247 = vrot.slane %v1222, %v1246
        %v1249 = vadd.f32 %v1242, %v1247
        %v1250 = vpack.c.bf16 %v1249, %v1249
        %s1251 = scalar_lea.vmem %s4, 16
        %v1252 = vld [vmem:[%s1251] sm:$0xf]
        %v1253 = vld [vmem:[%s1251 + $0x4] sm:$0xf]
        %v1254 = vld [vmem:[%s1251 + $0x8] sm:$0xf]
        %v1255 = vld [vmem:[%s1251 + $0xc] sm:$0xf]
        %s1256 = scalar_lea.vmem %s5, 1
        %v1257 = vld [vmem:[%s1256] sm:$0x1]
        %v1259 = vlaneseq
        %v1260 = vshrl.u32 %v1259, 7
        %v1261 = vsub.s32 0, %v1260
        %v1262 = vrot.slane %v1257, %v1261
        %v1268 = vunpack.c.l.b16 %v1252
        %v1269 = vunpack.c.l.b16 %v1253
        %v1270 = vunpack.c.l.b16 %v1254
        %v1271 = vunpack.c.l.b16 %v1255
        %v1272 = vpack.c.b16 %v1269, %v1268
        %v1273 = vpack.c.b16 %v1271, %v1270
        %v1277 = vsel %vm588, %v1250, 0
        %1279 = vmatprep.subr.bf16.mxu0 0
        %1280 = vmatpush1.bf16.msra.mxu0 %v1272
        %1281 = vmatprep.subr.bf16.mxu0 0
        %1282 = vmatpush1.bf16.msra.mxu0 %v1273
        %1283 = vmatprep.subr.bf16.mxu0 0
        %1284 = vmatpush1.bf16.msra.mxu0 0
        %1285 = vmatprep.subr.bf16.mxu0 0
        %1286 = vmatpush1.bf16.msra.mxu0 0
        %1287 = vmatprep.subr.bf16.mxu0 0
        %1288 = vmatpush1.bf16.msra.mxu0 0
        %1289 = vmatprep.subr.bf16.mxu0 0
        %1290 = vmatpush1.bf16.msra.mxu0 0
        %1291 = vmatprep.subr.bf16.mxu0 0
        %1292 = vmatpush1.bf16.msra.mxu0 0
        %1293 = vmatprep.subr.bf16.mxu0 0
        %1294 = vmatpush1.bf16.msra.mxu0 0
        %1295 = vmatprep.subr.bf16.mxu0 0
        %1296 = vmatpush1.bf16.msra.mxu0 0
        %1297 = vmatprep.subr.bf16.mxu0 0
        %1298 = vmatpush1.bf16.msra.mxu0 0
        %1299 = vmatprep.subr.bf16.mxu0 0
        %1300 = vmatpush1.bf16.msra.mxu0 0
        %1301 = vmatprep.subr.bf16.mxu0 0
        %1302 = vmatpush1.bf16.msra.mxu0 0
        %1303 = vmatprep.subr.bf16.mxu0 0
        %1304 = vmatpush1.bf16.msra.mxu0 0
        %1305 = vmatprep.subr.bf16.mxu0 0
        %1306 = vmatpush1.bf16.msra.mxu0 0
        %1307 = vmatprep.subr.bf16.mxu0 0
        %1308 = vmatpush1.bf16.msra.mxu0 0
        %1309 = vmatprep.subr.bf16.mxu0 0
        %1310 = vmatpush1.bf16.msra.mxu0 0
        %1311 = vmatprep.mubr.bf16.mxu0 0
        %1312 = vmatmul.mubr.bf16.gmra.mrb[0].mxu0 %v1277
        %v1313 = vpop.f32.mrb[0].mxu0
        %v1314 = vadd.f32 %v1262, %v1313
        %v1315 = vpop.f32.mrb[0].mxu0
        %v1316 = vpop.f32.mrb[0].mxu0
        %v1317 = vpop.f32.mrb[0].mxu0
        %1318 = vdwg.mxu0
        %s1319 = scalar_lea.vmem %s6, 16
        %v1320 = vld [vmem:[%s1319] sm:$0xf]
        %v1321 = vld [vmem:[%s1319 + $0x4] sm:$0xf]
        %v1322 = vld [vmem:[%s1319 + $0x8] sm:$0xf]
        %v1323 = vld [vmem:[%s1319 + $0xc] sm:$0xf]
        %v1324 = vpack.c.bf16 %v1314, %v1314
        %1326 = vrot.lane.b32.xlu0 %v1324, 96
        %v1327 = vpop.permute.xlu0 %1326
        %v1329 = vsel %vm693, %v1324, 0
        %v1332 = vsel %vm693, %v1327, 0
        %1334 = vmatprep.subr.bf16.mxu0 0
        %1335 = vmatpush1.bf16.xpose.msra.mxu0 %v1332
        %1336 = vmatprep.subr.bf16.mxu0 0
        %1337 = vmatpush1.bf16.xpose.msra.mxu0 0
        %1338 = vmatprep.subr.bf16.mxu0 0
        %1339 = vmatpush1.bf16.xpose.msra.mxu0 0
        %1340 = vmatprep.subr.bf16.mxu0 0
        %1341 = vmatpush1.bf16.xpose.msra.mxu0 0
        %1342 = vmatprep.subr.bf16.mxu0 0
        %1343 = vmatpush1.bf16.xpose.msra.mxu0 0
        %1344 = vmatprep.subr.bf16.mxu0 0
        %1345 = vmatpush1.bf16.xpose.msra.mxu0 0
        %1346 = vmatprep.subr.bf16.mxu0 0
        %1347 = vmatpush1.bf16.xpose.msra.mxu0 0
        %1348 = vmatprep.subr.bf16.mxu0 0
        %1349 = vmatpush1.bf16.xpose.msra.mxu0 0
        %1350 = vmatprep.subr.bf16.mxu0 0
        %1351 = vmatpush1.bf16.xpose.msra.mxu0 0
        %1352 = vmatprep.subr.bf16.mxu0 0
        %1353 = vmatpush1.bf16.xpose.msra.mxu0 0
        %1354 = vmatprep.subr.bf16.mxu0 0
        %1355 = vmatpush1.bf16.xpose.msra.mxu0 0
        %1356 = vmatprep.subr.bf16.mxu0 0
        %1357 = vmatpush1.bf16.xpose.msra.mxu0 0
        %1358 = vmatprep.subr.bf16.mxu0 0
        %1359 = vmatpush1.bf16.xpose.msra.mxu0 0
        %1360 = vmatprep.subr.bf16.mxu0 0
        %1361 = vmatpush1.bf16.xpose.msra.mxu0 0
        %1362 = vmatprep.subr.bf16.mxu0 0
        %1363 = vmatpush1.bf16.xpose.msra.mxu0 0
        %1364 = vmatprep.subr.bf16.mxu0 0
        %1365 = vmatpush1.bf16.xpose.msra.mxu0 0
        %1366 = vmatprep.mubr.bf16.mxu0 0
        %1367 = vmatmul.mubr.bf16.gmra.mrb[0].mxu0 %v1329
        %v1368 = vpop.f32.mrb[0].mxu0
        %v1369 = vadd.f32 0.0, %v1368
        %v1370 = vpop.f32.mrb[0].mxu0
        %v1371 = vpop.f32.mrb[0].mxu0
        %v1372 = vpop.f32.mrb[0].mxu0
        %1373 = vdwg.mxu0
        %v1374 = vmul.f32 %v1369, 0.25
        %v1375 = vadd.f32 %v1374, %v745
        %v1376 = vsel %vm748, %v1375, -inf
        %1377 = vmax.xlane.f32.xlu0 %v1376
        %v1378 = vpop.xlane.xlu0 %1377
        %v1379 = vsub.f32 %v1375, %v1378
        %v1380 = vmul.f32 %v1379, 1.442695
        %v1381 = vpow.pop %v1380
        %v1382 = vsel %vm748, %v1381, 0.0
        %1383 = vadd.xlane.f32.xlu0 %v1382
        %v1384 = vpop.xlane.xlu0 %1383
        %v1385 = vrcp.pop %v1384
        %v1386 = vmul.f32 %v1381, %v1385
        %v1387 = vpack.c.bf16 %v1386, %v1386
        %1388 = vrot.lane.b32.xlu0 %v1324, 64
        %v1389 = vpop.permute.xlu0 %1388
        %v1391 = vsel %vm748, %v1387, 0
        %v1394 = vsel %vm766, %v1389, 0
        %1396 = vmatprep.subr.bf16.mxu0 0
        %1397 = vmatpush1.bf16.msra.mxu0 %v1394
        %1398 = vmatprep.subr.bf16.mxu0 0
        %1399 = vmatpush1.bf16.msra.mxu0 0
        %1400 = vmatprep.subr.bf16.mxu0 0
        %1401 = vmatpush1.bf16.msra.mxu0 0
        %1402 = vmatprep.subr.bf16.mxu0 0
        %1403 = vmatpush1.bf16.msra.mxu0 0
        %1404 = vmatprep.subr.bf16.mxu0 0
        %1405 = vmatpush1.bf16.msra.mxu0 0
        %1406 = vmatprep.subr.bf16.mxu0 0
        %1407 = vmatpush1.bf16.msra.mxu0 0
        %1408 = vmatprep.subr.bf16.mxu0 0
        %1409 = vmatpush1.bf16.msra.mxu0 0
        %1410 = vmatprep.subr.bf16.mxu0 0
        %1411 = vmatpush1.bf16.msra.mxu0 0
        %1412 = vmatprep.subr.bf16.mxu0 0
        %1413 = vmatpush1.bf16.msra.mxu0 0
        %1414 = vmatprep.subr.bf16.mxu0 0
        %1415 = vmatpush1.bf16.msra.mxu0 0
        %1416 = vmatprep.subr.bf16.mxu0 0
        %1417 = vmatpush1.bf16.msra.mxu0 0
        %1418 = vmatprep.subr.bf16.mxu0 0
        %1419 = vmatpush1.bf16.msra.mxu0 0
        %1420 = vmatprep.subr.bf16.mxu0 0
        %1421 = vmatpush1.bf16.msra.mxu0 0
        %1422 = vmatprep.subr.bf16.mxu0 0
        %1423 = vmatpush1.bf16.msra.mxu0 0
        %1424 = vmatprep.subr.bf16.mxu0 0
        %1425 = vmatpush1.bf16.msra.mxu0 0
        %1426 = vmatprep.subr.bf16.mxu0 0
        %1427 = vmatpush1.bf16.msra.mxu0 0
        %1428 = vmatprep.mubr.bf16.mxu0 0
        %1429 = vmatmul.mubr.bf16.gmra.mrb[0].mxu0 %v1391
        %v1430 = vpop.f32.mrb[0].mxu0
        %v1431 = vadd.f32 0.0, %v1430
        %v1432 = vpop.f32.mrb[0].mxu0
        %v1433 = vpop.f32.mrb[0].mxu0
        %v1434 = vpop.f32.mrb[0].mxu0
        %1435 = vdwg.mxu0
        %v1436 = vpack.c.bf16 %v1431, %v1431
        %1437 = vrot.lane.b32.xlu0 %v1324, 112
        %v1438 = vpop.permute.xlu0 %1437
        %1439 = vrot.lane.b32.xlu0 %v1324, 80
        %v1440 = vpop.permute.xlu0 %1439
        %v1442 = vsel %vm693, %v1438, 0
        %v1445 = vsel %vm693, %v1440, 0
        %1447 = vmatprep.subr.bf16.mxu0 0
        %1448 = vmatpush1.bf16.xpose.msra.mxu0 %v1445
        %1449 = vmatprep.subr.bf16.mxu0 0
        %1450 = vmatpush1.bf16.xpose.msra.mxu0 0
        %1451 = vmatprep.subr.bf16.mxu0 0
        %1452 = vmatpush1.bf16.xpose.msra.mxu0 0
        %1453 = vmatprep.subr.bf16.mxu0 0
        %1454 = vmatpush1.bf16.xpose.msra.mxu0 0
        %1455 = vmatprep.subr.bf16.mxu0 0
        %1456 = vmatpush1.bf16.xpose.msra.mxu0 0
        %1457 = vmatprep.subr.bf16.mxu0 0
        %1458 = vmatpush1.bf16.xpose.msra.mxu0 0
        %1459 = vmatprep.subr.bf16.mxu0 0
        %1460 = vmatpush1.bf16.xpose.msra.mxu0 0
        %1461 = vmatprep.subr.bf16.mxu0 0
        %1462 = vmatpush1.bf16.xpose.msra.mxu0 0
        %1463 = vmatprep.subr.bf16.mxu0 0
        %1464 = vmatpush1.bf16.xpose.msra.mxu0 0
        %1465 = vmatprep.subr.bf16.mxu0 0
        %1466 = vmatpush1.bf16.xpose.msra.mxu0 0
        %1467 = vmatprep.subr.bf16.mxu0 0
        %1468 = vmatpush1.bf16.xpose.msra.mxu0 0
        %1469 = vmatprep.subr.bf16.mxu0 0
        %1470 = vmatpush1.bf16.xpose.msra.mxu0 0
        %1471 = vmatprep.subr.bf16.mxu0 0
        %1472 = vmatpush1.bf16.xpose.msra.mxu0 0
        %1473 = vmatprep.subr.bf16.mxu0 0
        %1474 = vmatpush1.bf16.xpose.msra.mxu0 0
        %1475 = vmatprep.subr.bf16.mxu0 0
        %1476 = vmatpush1.bf16.xpose.msra.mxu0 0
        %1477 = vmatprep.subr.bf16.mxu0 0
        %1478 = vmatpush1.bf16.xpose.msra.mxu0 0
        %1479 = vmatprep.mubr.bf16.mxu0 0
        %1480 = vmatmul.mubr.bf16.gmra.mrb[0].mxu0 %v1442
        %v1481 = vpop.f32.mrb[0].mxu0
        %v1482 = vadd.f32 0.0, %v1481
        %v1483 = vpop.f32.mrb[0].mxu0
        %v1484 = vpop.f32.mrb[0].mxu0
        %v1485 = vpop.f32.mrb[0].mxu0
        %1486 = vdwg.mxu0
        %v1487 = vmul.f32 %v1482, 0.25
        %v1488 = vadd.f32 %v1487, %v745
        %v1489 = vsel %vm748, %v1488, -inf
        %1490 = vmax.xlane.f32.xlu0 %v1489
        %v1491 = vpop.xlane.xlu0 %1490
        %v1492 = vsub.f32 %v1488, %v1491
        %v1493 = vmul.f32 %v1492, 1.442695
        %v1494 = vpow.pop %v1493
        %v1495 = vsel %vm748, %v1494, 0.0
        %1496 = vadd.xlane.f32.xlu0 %v1495
        %v1497 = vpop.xlane.xlu0 %1496
        %v1498 = vrcp.pop %v1497
        %v1499 = vmul.f32 %v1494, %v1498
        %v1500 = vpack.c.bf16 %v1499, %v1499
        %1501 = vrot.lane.b32.xlu0 %v1324, 48
        %v1502 = vpop.permute.xlu0 %1501
        %v1504 = vsel %vm748, %v1500, 0
        %v1507 = vsel %vm766, %v1502, 0
        %1509 = vmatprep.subr.bf16.mxu0 0
        %1510 = vmatpush1.bf16.msra.mxu0 %v1507
        %1511 = vmatprep.subr.bf16.mxu0 0
        %1512 = vmatpush1.bf16.msra.mxu0 0
        %1513 = vmatprep.subr.bf16.mxu0 0
        %1514 = vmatpush1.bf16.msra.mxu0 0
        %1515 = vmatprep.subr.bf16.mxu0 0
        %1516 = vmatpush1.bf16.msra.mxu0 0
        %1517 = vmatprep.subr.bf16.mxu0 0
        %1518 = vmatpush1.bf16.msra.mxu0 0
        %1519 = vmatprep.subr.bf16.mxu0 0
        %1520 = vmatpush1.bf16.msra.mxu0 0
        %1521 = vmatprep.subr.bf16.mxu0 0
        %1522 = vmatpush1.bf16.msra.mxu0 0
        %1523 = vmatprep.subr.bf16.mxu0 0
        %1524 = vmatpush1.bf16.msra.mxu0 0
        %1525 = vmatprep.subr.bf16.mxu0 0
        %1526 = vmatpush1.bf16.msra.mxu0 0
        %1527 = vmatprep.subr.bf16.mxu0 0
        %1528 = vmatpush1.bf16.msra.mxu0 0
        %1529 = vmatprep.subr.bf16.mxu0 0
        %1530 = vmatpush1.bf16.msra.mxu0 0
        %1531 = vmatprep.subr.bf16.mxu0 0
        %1532 = vmatpush1.bf16.msra.mxu0 0
        %1533 = vmatprep.subr.bf16.mxu0 0
        %1534 = vmatpush1.bf16.msra.mxu0 0
        %1535 = vmatprep.subr.bf16.mxu0 0
        %1536 = vmatpush1.bf16.msra.mxu0 0
        %1537 = vmatprep.subr.bf16.mxu0 0
        %1538 = vmatpush1.bf16.msra.mxu0 0
        %1539 = vmatprep.subr.bf16.mxu0 0
        %1540 = vmatpush1.bf16.msra.mxu0 0
        %1541 = vmatprep.mubr.bf16.mxu0 0
        %1542 = vmatmul.mubr.bf16.gmra.mrb[0].mxu0 %v1504
        %v1543 = vpop.f32.mrb[0].mxu0
        %v1544 = vadd.f32 0.0, %v1543
        %v1545 = vpop.f32.mrb[0].mxu0
        %v1546 = vpop.f32.mrb[0].mxu0
        %v1547 = vpop.f32.mrb[0].mxu0
        %1548 = vdwg.mxu0
        %v1549 = vpack.c.bf16 %v1544, %v1544
        %v1552 = vunpack.c.l.b16 %v1322
        %v1553 = vunpack.c.l.b16 %v1323
        %v1554 = vpack.c.b16 %v1553, %v1552
        %v1557 = vsel %vm693, %v1549, 0
        %1559 = vmatprep.subr.bf16.mxu0 0
        %1560 = vmatpush1.bf16.msra.mxu0 %v1554
        %1561 = vmatprep.subr.bf16.mxu0 0
        %1562 = vmatpush1.bf16.msra.mxu0 0
        %1563 = vmatprep.subr.bf16.mxu0 0
        %1564 = vmatpush1.bf16.msra.mxu0 0
        %1565 = vmatprep.subr.bf16.mxu0 0
        %1566 = vmatpush1.bf16.msra.mxu0 0
        %1567 = vmatprep.subr.bf16.mxu0 0
        %1568 = vmatpush1.bf16.msra.mxu0 0
        %1569 = vmatprep.subr.bf16.mxu0 0
        %1570 = vmatpush1.bf16.msra.mxu0 0
        %1571 = vmatprep.subr.bf16.mxu0 0
        %1572 = vmatpush1.bf16.msra.mxu0 0
        %1573 = vmatprep.subr.bf16.mxu0 0
        %1574 = vmatpush1.bf16.msra.mxu0 0
        %1575 = vmatprep.subr.bf16.mxu0 0
        %1576 = vmatpush1.bf16.msra.mxu0 0
        %1577 = vmatprep.subr.bf16.mxu0 0
        %1578 = vmatpush1.bf16.msra.mxu0 0
        %1579 = vmatprep.subr.bf16.mxu0 0
        %1580 = vmatpush1.bf16.msra.mxu0 0
        %1581 = vmatprep.subr.bf16.mxu0 0
        %1582 = vmatpush1.bf16.msra.mxu0 0
        %1583 = vmatprep.subr.bf16.mxu0 0
        %1584 = vmatpush1.bf16.msra.mxu0 0
        %1585 = vmatprep.subr.bf16.mxu0 0
        %1586 = vmatpush1.bf16.msra.mxu0 0
        %1587 = vmatprep.subr.bf16.mxu0 0
        %1588 = vmatpush1.bf16.msra.mxu0 0
        %1589 = vmatprep.subr.bf16.mxu0 0
        %1590 = vmatpush1.bf16.msra.mxu0 0
        %1591 = vmatprep.mubr.bf16.mxu0 0
        %1592 = vmatmul.mubr.bf16.gmra.mrb[0].mxu0 %v1557
        %v1593 = vpop.f32.mrb[0].mxu0
        %v1594 = vadd.f32 0.0, %v1593
        %v1595 = vpop.f32.mrb[0].mxu0
        %v1596 = vpop.f32.mrb[0].mxu0
        %v1597 = vpop.f32.mrb[0].mxu0
        %1598 = vdwg.mxu0
        %v1601 = vunpack.c.l.b16 %v1320
        %v1602 = vunpack.c.l.b16 %v1321
        %v1603 = vpack.c.b16 %v1602, %v1601
        %v1606 = vsel %vm693, %v1436, 0
        %1608 = vmatprep.subr.bf16.mxu0 0
        %1609 = vmatpush1.bf16.msra.mxu0 %v1603
        %1610 = vmatprep.subr.bf16.mxu0 0
        %1611 = vmatpush1.bf16.msra.mxu0 0
        %1612 = vmatprep.subr.bf16.mxu0 0
        %1613 = vmatpush1.bf16.msra.mxu0 0
        %1614 = vmatprep.subr.bf16.mxu0 0
        %1615 = vmatpush1.bf16.msra.mxu0 0
        %1616 = vmatprep.subr.bf16.mxu0 0
        %1617 = vmatpush1.bf16.msra.mxu0 0
        %1618 = vmatprep.subr.bf16.mxu0 0
        %1619 = vmatpush1.bf16.msra.mxu0 0
        %1620 = vmatprep.subr.bf16.mxu0 0
        %1621 = vmatpush1.bf16.msra.mxu0 0
        %1622 = vmatprep.subr.bf16.mxu0 0
        %1623 = vmatpush1.bf16.msra.mxu0 0
        %1624 = vmatprep.subr.bf16.mxu0 0
        %1625 = vmatpush1.bf16.msra.mxu0 0
        %1626 = vmatprep.subr.bf16.mxu0 0
        %1627 = vmatpush1.bf16.msra.mxu0 0
        %1628 = vmatprep.subr.bf16.mxu0 0
        %1629 = vmatpush1.bf16.msra.mxu0 0
        %1630 = vmatprep.subr.bf16.mxu0 0
        %1631 = vmatpush1.bf16.msra.mxu0 0
        %1632 = vmatprep.subr.bf16.mxu0 0
        %1633 = vmatpush1.bf16.msra.mxu0 0
        %1634 = vmatprep.subr.bf16.mxu0 0
        %1635 = vmatpush1.bf16.msra.mxu0 0
        %1636 = vmatprep.subr.bf16.mxu0 0
        %1637 = vmatpush1.bf16.msra.mxu0 0
        %1638 = vmatprep.subr.bf16.mxu0 0
        %1639 = vmatpush1.bf16.msra.mxu0 0
        %1640 = vmatprep.mubr.bf16.mxu0 0
        %1641 = vmatmul.mubr.bf16.gmra.mrb[0].mxu0 %v1606
        %v1642 = vpop.f32.mrb[0].mxu0
        %v1643 = vadd.f32 %v1594, %v1642
        %v1644 = vpop.f32.mrb[0].mxu0
        %v1645 = vpop.f32.mrb[0].mxu0
        %v1646 = vpop.f32.mrb[0].mxu0
        %1647 = vdwg.mxu0
        %s1648 = scalar_lea.vmem %s7, 1
        %v1649 = vld [vmem:[%s1648] sm:$0x1]
        %v1651 = vlaneseq
        %v1652 = vshrl.u32 %v1651, 7
        %v1653 = vsub.s32 0, %v1652
        %v1654 = vrot.slane %v1649, %v1653
        %v1656 = vadd.f32 %v1643, %v1654
        %v1657 = vadd.f32 %v1656, %v1249
        %s1658 = scalar_lea.vmem %s8, 1
        %v1659 = vld [vmem:[%s1658] sm:$0x1]
        %s1660 = scalar_lea.vmem %s9, 1
        %v1661 = vld [vmem:[%s1660] sm:$0x1]
        %v1662 = vsel %vm588, %v1657, 0.0
        %1663 = vadd.xlane.f32.xlu0 %v1662
        %v1664 = vpop.xlane.xlu0 %1663
        %v1665 = vmul.f32 %v1664, %v592
        %v1666 = vsub.f32 %v1657, %v1665
        %v1667 = vmul.f32 %v1666, %v1666
        %v1668 = vsel %vm588, %v1667, 0.0
        %1669 = vadd.xlane.f32.xlu0 %v1668
        %v1670 = vpop.xlane.xlu0 %1669
        %v1671 = vmul.f32 %v1670, %v592
        %v1672 = vadd.f32 %v1671, 1e-12
        %v1673 = vrsqrt.pop %v1672
        %v1674 = vmul.f32 %v1666, %v1673
        %v1676 = vlaneseq
        %v1677 = vshrl.u32 %v1676, 7
        %v1678 = vsub.s32 0, %v1677
        %v1679 = vrot.slane %v1659, %v1678
        %v1681 = vmul.f32 %v1674, %v1679
        %v1683 = vlaneseq
        %v1684 = vshrl.u32 %v1683, 7
        %v1685 = vsub.s32 0, %v1684
        %v1686 = vrot.slane %v1661, %v1685
        %v1688 = vadd.f32 %v1681, %v1686
        %v1689 = vpack.c.bf16 %v1688, %v1688
        %s1690 = scalar_lea.vmem %s10, 16
        %v1691 = vld [vmem:[%s1690] sm:$0xf]
        %v1692 = vld [vmem:[%s1690 + $0x4] sm:$0xf]
        %v1693 = vld [vmem:[%s1690 + $0x8] sm:$0xf]
        %v1694 = vld [vmem:[%s1690 + $0xc] sm:$0xf]
        %s1695 = scalar_lea.vmem %s11, 1
        %v1696 = vld [vmem:[%s1695] sm:$0x1]
        %v1698 = vlaneseq
        %v1699 = vshrl.u32 %v1698, 7
        %v1700 = vsub.s32 0, %v1699
        %v1701 = vrot.slane %v1696, %v1700
        %v1707 = vunpack.c.l.b16 %v1691
        %v1708 = vunpack.c.l.b16 %v1692
        %v1709 = vunpack.c.l.b16 %v1693
        %v1710 = vunpack.c.l.b16 %v1694
        %v1711 = vpack.c.b16 %v1708, %v1707
        %v1712 = vpack.c.b16 %v1710, %v1709
        %v1716 = vsel %vm588, %v1689, 0
        %1718 = vmatprep.subr.bf16.mxu0 0
        %1719 = vmatpush1.bf16.msra.mxu0 %v1711
        %1720 = vmatprep.subr.bf16.mxu0 0
        %1721 = vmatpush1.bf16.msra.mxu0 %v1712
        %1722 = vmatprep.subr.bf16.mxu0 0
        %1723 = vmatpush1.bf16.msra.mxu0 0
        %1724 = vmatprep.subr.bf16.mxu0 0
        %1725 = vmatpush1.bf16.msra.mxu0 0
        %1726 = vmatprep.subr.bf16.mxu0 0
        %1727 = vmatpush1.bf16.msra.mxu0 0
        %1728 = vmatprep.subr.bf16.mxu0 0
        %1729 = vmatpush1.bf16.msra.mxu0 0
        %1730 = vmatprep.subr.bf16.mxu0 0
        %1731 = vmatpush1.bf16.msra.mxu0 0
        %1732 = vmatprep.subr.bf16.mxu0 0
        %1733 = vmatpush1.bf16.msra.mxu0 0
        %1734 = vmatprep.subr.bf16.mxu0 0
        %1735 = vmatpush1.bf16.msra.mxu0 0
        %1736 = vmatprep.subr.bf16.mxu0 0
        %1737 = vmatpush1.bf16.msra.mxu0 0
        %1738 = vmatprep.subr.bf16.mxu0 0
        %1739 = vmatpush1.bf16.msra.mxu0 0
        %1740 = vmatprep.subr.bf16.mxu0 0
        %1741 = vmatpush1.bf16.msra.mxu0 0
        %1742 = vmatprep.subr.bf16.mxu0 0
        %1743 = vmatpush1.bf16.msra.mxu0 0
        %1744 = vmatprep.subr.bf16.mxu0 0
        %1745 = vmatpush1.bf16.msra.mxu0 0
        %1746 = vmatprep.subr.bf16.mxu0 0
        %1747 = vmatpush1.bf16.msra.mxu0 0
        %1748 = vmatprep.subr.bf16.mxu0 0
        %1749 = vmatpush1.bf16.msra.mxu0 0
        %1750 = vmatprep.mubr.bf16.mxu0 0
        %1751 = vmatmul.mubr.bf16.gmra.mrb[0].mxu0 %v1716
        %v1752 = vpop.f32.mrb[0].mxu0
        %v1753 = vadd.f32 %v1701, %v1752
        %v1754 = vpop.f32.mrb[0].mxu0
        %v1755 = vpop.f32.mrb[0].mxu0
        %v1756 = vpop.f32.mrb[0].mxu0
        %1757 = vdwg.mxu0
        %v1758 = vmul.f32 %v1753, %v1753
        %v1759 = vmul.f32 %v1753, %v1758
        %v1760 = vmul.f32 %v1759, 0.044715
        %v1761 = vadd.f32 %v1753, %v1760
        %v1762 = vmul.f32 %v1761, 0.7978846
        %v1763 = vtanh.pop %v1762
        %v1764 = vadd.f32 %v1763, 1.0
        %v1765 = vmul.f32 %v1764, 0.5
        %v1766 = vmul.f32 %v1753, %v1765
        %v1767 = vpack.c.bf16 %v1766, %v1766
        %s1768 = scalar_lea.vmem %s12, 32
        %v1769 = vld [vmem:[%s1768] sm:$0xf]
        %v1770 = vld [vmem:[%s1768 + $0x4] sm:$0xf]
        %v1771 = vld [vmem:[%s1768 + $0x8] sm:$0xf]
        %v1772 = vld [vmem:[%s1768 + $0xc] sm:$0xf]
        %v1773 = vld [vmem:[%s1768 + $0x10] sm:$0xf]
        %v1774 = vld [vmem:[%s1768 + $0x14] sm:$0xf]
        %v1775 = vld [vmem:[%s1768 + $0x18] sm:$0xf]
        %v1776 = vld [vmem:[%s1768 + $0x1c] sm:$0xf]
        %s1777 = scalar_lea.vmem %s13, 1
        %v1778 = vld [vmem:[%s1777] sm:$0x1]
        %v1780 = vlaneseq
        %v1781 = vshrl.u32 %v1780, 7
        %v1782 = vsub.s32 0, %v1781
        %v1783 = vrot.slane %v1778, %v1782
        %v1793 = vunpack.c.l.b16 %v1769
        %v1794 = vunpack.c.l.b16 %v1770
        %v1795 = vunpack.c.l.b16 %v1771
        %v1796 = vunpack.c.l.b16 %v1772
        %v1797 = vunpack.c.l.b16 %v1773
        %v1798 = vunpack.c.l.b16 %v1774
        %v1799 = vunpack.c.l.b16 %v1775
        %v1800 = vunpack.c.l.b16 %v1776
        %v1801 = vpack.c.b16 %v1794, %v1793
        %v1802 = vpack.c.b16 %v1796, %v1795
        %v1803 = vpack.c.b16 %v1798, %v1797
        %v1804 = vpack.c.b16 %v1800, %v1799
        %v1810 = vsel %vm1176, %v1767, 0
        %1812 = vmatprep.subr.bf16.mxu0 0
        %1813 = vmatpush1.bf16.msra.mxu0 %v1801
        %1814 = vmatprep.subr.bf16.mxu0 0
        %1815 = vmatpush1.bf16.msra.mxu0 %v1802
        %1816 = vmatprep.subr.bf16.mxu0 0
        %1817 = vmatpush1.bf16.msra.mxu0 %v1803
        %1818 = vmatprep.subr.bf16.mxu0 0
        %1819 = vmatpush1.bf16.msra.mxu0 %v1804
        %1820 = vmatprep.subr.bf16.mxu0 0
        %1821 = vmatpush1.bf16.msra.mxu0 0
        %1822 = vmatprep.subr.bf16.mxu0 0
        %1823 = vmatpush1.bf16.msra.mxu0 0
        %1824 = vmatprep.subr.bf16.mxu0 0
        %1825 = vmatpush1.bf16.msra.mxu0 0
        %1826 = vmatprep.subr.bf16.mxu0 0
        %1827 = vmatpush1.bf16.msra.mxu0 0
        %1828 = vmatprep.subr.bf16.mxu0 0
        %1829 = vmatpush1.bf16.msra.mxu0 0
        %1830 = vmatprep.subr.bf16.mxu0 0
        %1831 = vmatpush1.bf16.msra.mxu0 0
        %1832 = vmatprep.subr.bf16.mxu0 0
        %1833 = vmatpush1.bf16.msra.mxu0 0
        %1834 = vmatprep.subr.bf16.mxu0 0
        %1835 = vmatpush1.bf16.msra.mxu0 0
        %1836 = vmatprep.subr.bf16.mxu0 0
        %1837 = vmatpush1.bf16.msra.mxu0 0
        %1838 = vmatprep.subr.bf16.mxu0 0
        %1839 = vmatpush1.bf16.msra.mxu0 0
        %1840 = vmatprep.subr.bf16.mxu0 0
        %1841 = vmatpush1.bf16.msra.mxu0 0
        %1842 = vmatprep.subr.bf16.mxu0 0
        %1843 = vmatpush1.bf16.msra.mxu0 0
        %1844 = vmatprep.mubr.bf16.mxu0 0
        %1845 = vmatmul.mubr.bf16.gmra.mrb[0].mxu0 %v1810
        %v1846 = vpop.f32.mrb[0].mxu0
        %v1847 = vadd.f32 %v1783, %v1846
        %v1848 = vpop.f32.mrb[0].mxu0
        %v1849 = vpop.f32.mrb[0].mxu0
        %v1850 = vpop.f32.mrb[0].mxu0
        %1851 = vdwg.mxu0
        %v1852 = vadd.f32 %v1847, %v1688
        %s1853 = scalar_lea.vmem %s14, 1
        %v1854 = vld [vmem:[%s1853] sm:$0x1]
        %s1855 = scalar_lea.vmem %s15, 1
        %v1856 = vld [vmem:[%s1855] sm:$0x1]
        %v1857 = vsel %vm588, %v1852, 0.0
        %1858 = vadd.xlane.f32.xlu0 %v1857
        %v1859 = vpop.xlane.xlu0 %1858
        %v1860 = vmul.f32 %v1859, %v592
        %v1861 = vsub.f32 %v1852, %v1860
        %v1862 = vmul.f32 %v1861, %v1861
        %v1863 = vsel %vm588, %v1862, 0.0
        %1864 = vadd.xlane.f32.xlu0 %v1863
        %v1865 = vpop.xlane.xlu0 %1864
        %v1866 = vmul.f32 %v1865, %v592
        %v1867 = vadd.f32 %v1866, 1e-12
        %v1868 = vrsqrt.pop %v1867
        %v1869 = vmul.f32 %v1861, %v1868
        %v1871 = vlaneseq
        %v1872 = vshrl.u32 %v1871, 7
        %v1873 = vsub.s32 0, %v1872
        %v1874 = vrot.slane %v1854, %v1873
        %v1876 = vmul.f32 %v1869, %v1874
        %v1878 = vlaneseq
        %v1879 = vshrl.u32 %v1878, 7
        %v1880 = vsub.s32 0, %v1879
        %v1881 = vrot.slane %v1856, %v1880
        %v1883 = vadd.f32 %v1876, %v1881
        %v1884 = vpack.c.bf16 %v1883, %v1883
        %v1885 = vld [vmem:[%s16] sm:$0xf]
        %v1886 = vld [vmem:[%s16 + $0x4] sm:$0xf]
        %v1887 = vld [vmem:[%s16 + $0x8] sm:$0xf]
        %v1888 = vld [vmem:[%s16 + $0xc] sm:$0xf]
        %v1889 = vld [vmem:[%s17] sm:$0x1]
        %v1894 = vunpack.c.l.b16 %v1885
        %v1895 = vunpack.c.l.b16 %v1886
        %v1896 = vunpack.c.l.b16 %v1887
        %v1897 = vunpack.c.l.b16 %v1888
        %v1898 = vpack.c.b16 %v1895, %v1894
        %v1899 = vpack.c.b16 %v1897, %v1896
        %v1903 = vsel %vm588, %v1884, 0
        %1905 = vmatprep.subr.bf16.mxu0 0
        %1906 = vmatpush1.bf16.msra.mxu0 %v1898
        %1907 = vmatprep.subr.bf16.mxu0 0
        %1908 = vmatpush1.bf16.msra.mxu0 %v1899
        %1909 = vmatprep.subr.bf16.mxu0 0
        %1910 = vmatpush1.bf16.msra.mxu0 0
        %1911 = vmatprep.subr.bf16.mxu0 0
        %1912 = vmatpush1.bf16.msra.mxu0 0
        %1913 = vmatprep.subr.bf16.mxu0 0
        %1914 = vmatpush1.bf16.msra.mxu0 0
        %1915 = vmatprep.subr.bf16.mxu0 0
        %1916 = vmatpush1.bf16.msra.mxu0 0
        %1917 = vmatprep.subr.bf16.mxu0 0
        %1918 = vmatpush1.bf16.msra.mxu0 0
        %1919 = vmatprep.subr.bf16.mxu0 0
        %1920 = vmatpush1.bf16.msra.mxu0 0
        %1921 = vmatprep.subr.bf16.mxu0 0
        %1922 = vmatpush1.bf16.msra.mxu0 0
        %1923 = vmatprep.subr.bf16.mxu0 0
        %1924 = vmatpush1.bf16.msra.mxu0 0
        %1925 = vmatprep.subr.bf16.mxu0 0
        %1926 = vmatpush1.bf16.msra.mxu0 0
        %1927 = vmatprep.subr.bf16.mxu0 0
        %1928 = vmatpush1.bf16.msra.mxu0 0
        %1929 = vmatprep.subr.bf16.mxu0 0
        %1930 = vmatpush1.bf16.msra.mxu0 0
        %1931 = vmatprep.subr.bf16.mxu0 0
        %1932 = vmatpush1.bf16.msra.mxu0 0
        %1933 = vmatprep.subr.bf16.mxu0 0
        %1934 = vmatpush1.bf16.msra.mxu0 0
        %1935 = vmatprep.subr.bf16.mxu0 0
        %1936 = vmatpush1.bf16.msra.mxu0 0
        %1937 = vmatprep.mubr.bf16.mxu0 0
        %1938 = vmatmul.mubr.bf16.gmra.mrb[0].mxu0 %v1903
        %v1939 = vpop.f32.mrb[0].mxu0
        %v1940 = vadd.f32 %v1889, %v1939
        %v1941 = vpop.f32.mrb[0].mxu0
        %v1942 = vpop.f32.mrb[0].mxu0
        %v1943 = vpop.f32.mrb[0].mxu0
        %1944 = vdwg.mxu0
        %1945 = vst [vmem:[%s576] sm:$0x1] %v1940
        %s1946 = sand.u32 %s428, 1
        %s1947 = scalar_lea.sflag [#allocation3], %s1946
        %s1948 = sand.u32 %s428, 1
        %s1949 = scalar_lea.vmem [#allocation2], %s1948
        // Predicated region
        $region93: #{gatortron_with_classifier.1} parent=91 // pred_check
          %p1950 = pneg %p438
        $region94: #{gatortron_with_classifier.1} parent=91 // pred_check_branch
          %1952 = sbr.rel (%p1950) target = $region96
        $region95: #{gatortron_with_classifier.1} parent=91 // pred_region
          %s1954 = ssub.s32 16, 16
          %1955 = vsyncadd %s1947, %s1954
          %s1956 = smul.addr %s32, 16
          %s1957 = scalar_lea.hbm %s18, %s1956
          %s1959 = sshll.u32 %s1949, 4
          %s1960 = int_to_ptr.vmem [resolvable:$true] %s1959
          %1962 = dma.vmem_to_hbm [thread:$0]  %s1960, 16, %s1957, %s1947
        $region96: #{gatortron_with_classifier.1} parent=91 // pred_fallthru
          _
      $region92: #{gatortron_with_classifier.1} parent=5 // pred_fallthru
        _
      %p1963 = scmp.le.s32.totalorder 2, %s27
      // Predicated region
      $region97: #{gatortron_with_classifier.1} parent=5 // pred_check
        %p1964 = pneg %p1963
      $region98: #{gatortron_with_classifier.1} parent=5 // pred_check_branch
        %1966 = sbr.rel (%p1964) target = $region100
      $region99: #{gatortron_with_classifier.1} parent=5 // pred_region
        %s1967 = ssub.s32 %s27, 2
        // Predicated region
        $region101: #{gatortron_with_classifier.1} parent=99 // pred_check
          %p1968 = pneg %p444
        $region102: #{gatortron_with_classifier.1} parent=99 // pred_check_branch
          %1970 = sbr.rel (%p1968) target = $region104
        $region103: #{gatortron_with_classifier.1} parent=99 // pred_region
          %s1971 = sand.u32 %s429, 1
          %s1972 = scalar_lea.sflag [#allocation3], %s1971
          %s1973 = sand.u32 %s429, 1
          %s1974 = scalar_lea.vmem [#allocation2], %s1973
          %1975 = dma.done %s1972, 16
        $region104: #{gatortron_with_classifier.1} parent=99 // pred_fallthru
          _
      $region100: #{gatortron_with_classifier.1} parent=5 // pred_fallthru
        _
    $region6: #{gatortron_with_classifier.1} parent=1 // loop_footer
      %s31 = sadd.s32 1, %s27
    $region7: #{gatortron_with_classifier.1} parent=1 // loop_footer_branch
      %26 = sbr.rel target = $region3
    $region8: #{gatortron_with_classifier.1} parent=1 // loop_exit
      _
    %1976 = vsyncpa [#allocation3], 1
    %s1977 = scalar_lea.sflag [#allocation3], 1
    %1978 = vsyncpa %s1977, 1

</llo_original>
